<compile_context>
chip_gen: v5e
topology: v5e:2x2
jax: 0.10.0
libtpu: 0.0.40
codegen_flags: <defaults>
</compile_context>

<pallas_src>
import functools

import jax
import jax.numpy as jnp
from jax.experimental import pallas as pl
from jax.experimental.pallas import tpu as pltpu


# ---------------------------------------------------------------------------
# Helpers
# ---------------------------------------------------------------------------
def _round_up(x, m):
    return ((x + m - 1) // m) * m


def _pad2(a, rows, cols):
    return jnp.pad(a, ((0, rows - a.shape[0]), (0, cols - a.shape[1])))


def _pad1(v, n):
    return jnp.pad(v, (0, n - v.shape[0]))


def _vmem_limit_bytes():
    """Generation-aware VMEM cap: ~96 MiB on 128 MiB parts (v5e/v6e), 48 MiB on v7x."""
    try:
        info = pltpu.get_tpu_info()
        cap = getattr(info, "vmem_capacity_bytes", None)
        if cap is None:
            return 48 * 1024 * 1024
        return min(int(cap) * 3 // 4, 100 * 1024 * 1024)
    except Exception:
        return 48 * 1024 * 1024


def _pick_tile_m(n_p):
    """Row tile: prefer 512, but keep >=2 row tiles so v7x's 2 TensorCores both work."""
    if n_p % 512 == 0 and n_p // 512 >= 2:
        return 512
    if n_p % 256 == 0 and n_p // 256 >= 2:
        return 256
    return min(n_p, 256)


def _pick_tile_k(kdim, tile_m, n_out, vmem_limit, extra_col_bytes=0):
    """Largest K tile (full-K preferred -> resident B operand) that fits the VMEM budget."""
    budget = int(vmem_limit * 0.6)
    cands = [kdim] + [c for c in (2048, 1024, 512, 256, 128)
                      if c < kdim and kdim % c == 0]
    for tk in cands:
        need = (2 * tile_m * tk * 2          # double-buffered A/H tile (bf16)
                + 2 * tk * n_out * 2         # double-buffered B/W tile (bf16)
                + 2 * tile_m * n_out * 4     # double-buffered output tile (<=4B/elem)
                + tile_m * n_out * 4         # f32 accumulator scratch
                + 2 * tk * extra_col_bytes)  # per-K-column extras (stats/gamma/beta)
        if need <= budget:
            return tk
    return 128


def _cparams(vmem_limit):
    return pltpu.CompilerParams(
        dimension_semantics=("parallel", "arbitrary"),
        vmem_limit_bytes=int(vmem_limit),
    )


# ---------------------------------------------------------------------------
# Kernels (grid = (row tiles [parallel], K tiles [arbitrary]))
# ---------------------------------------------------------------------------
def _mm_kernel(a_ref, b_ref, o_ref, acc_ref):
    """out = sum_k a[:, k] @ b[k, :] with an f32 VMEM accumulator."""
    k = pl.program_id(1)
    last = pl.num_programs(1) - 1

    @pl.when(k == 0)
    def _init():
        acc_ref[...] = jnp.zeros_like(acc_ref)

    acc_ref[...] += jnp.dot(a_ref[...], b_ref[...],
                            preferred_element_type=jnp.float32)

    @pl.when(k == last)
    def _fin():
        o_ref[...] = acc_ref[...].astype(o_ref.dtype)


def _mm_bias_kernel(a_ref, b_ref, bias_ref, o_ref, acc_ref):
    """out = (sum_k a @ b) + bias."""
    k = pl.program_id(1)
    last = pl.num_programs(1) - 1

    @pl.when(k == 0)
    def _init():
        acc_ref[...] = jnp.zeros_like(acc_ref)

    acc_ref[...] += jnp.dot(a_ref[...], b_ref[...],
                            preferred_element_type=jnp.float32)

    @pl.when(k == last)
    def _fin():
        o_ref[...] = (acc_ref[...] + bias_ref[...]).astype(o_ref.dtype)


def _mm_stats_kernel(a_ref, b_ref, o_ref, stats_ref, acc_ref):
    """Matmul + per-row-tile column sums / sums-of-squares (for one-pass BatchNorm).

    Padded node rows of the A operand are exactly zero, so the unmasked column
    sums of the f32 accumulator equal the sums over the valid nodes.  Stats are
    taken from the f32 accumulator before the bf16 cast of the main output.
    Only rows 0 (sum) and 1 (sum of squares) of each 8-row stats block are
    written; the consumer masks the remaining rows.
    """
    k = pl.program_id(1)
    last = pl.num_programs(1) - 1

    @pl.when(k == 0)
    def _init():
        acc_ref[...] = jnp.zeros_like(acc_ref)

    acc_ref[...] += jnp.dot(a_ref[...], b_ref[...],
                            preferred_element_type=jnp.float32)

    @pl.when(k == last)
    def _fin():
        h = acc_ref[...]
        o_ref[...] = h.astype(o_ref.dtype)
        stats_ref[0:1, :] = jnp.sum(h, axis=0, keepdims=True)
        stats_ref[1:2, :] = jnp.sum(h * h, axis=0, keepdims=True)


def _bn_act_mm_kernel(inv_n, eps, h_ref, stats_ref, gamma_ref, beta_ref, w_ref,
                      alpha_ref, o_ref, acc_ref):
    """Fused BatchNorm(batch stats) + PReLU + (H @ W2).

    The per-feature scale/shift is derived in-kernel from the per-row-tile stats
    (rows 8*t+0 = sums, 8*t+1 = sums of squares of tile t); conv1's bias cancels
    under training-mode BatchNorm so it never appears.
    """
    k = pl.program_id(1)
    last = pl.num_programs(1) - 1

    @pl.when(k == 0)
    def _init():
        acc_ref[...] = jnp.zeros_like(acc_ref)

    st = stats_ref[...]                                            # (m_tiles*8, tk) f32
    ridx = jax.lax.broadcasted_iota(jnp.int32, st.shape, 0) % 8
    s1 = jnp.sum(jnp.where(ridx == 0, st, 0.0), axis=0, keepdims=True)
    s2 = jnp.sum(jnp.where(ridx == 1, st, 0.0), axis=0, keepdims=True)
    mean = s1 * inv_n
    var = s2 * inv_n - mean * mean                                 # one-pass (f32)
    scale = gamma_ref[...] * jax.lax.rsqrt(var + eps)
    shift = beta_ref[...] - mean * scale

    h = h_ref[...].astype(jnp.float32) * scale + shift             # folded BatchNorm
    h = jnp.where(h > 0, h, alpha_ref[...] * h)                    # PReLU
    acc_ref[...] += jnp.dot(h.astype(w_ref.dtype), w_ref[...],
                            preferred_element_type=jnp.float32)

    @pl.when(k == last)
    def _fin():
        o_ref[...] = acc_ref[...].astype(o_ref.dtype)


# ---------------------------------------------------------------------------
# Tiled pallas_call wrappers
# ---------------------------------------------------------------------------
def _tiled_mm(a, b, *, out_dtype, tile_m, vmem_limit):
    m, kdim = a.shape
    _, n_out = b.shape
    tk = _pick_tile_k(kdim, tile_m, n_out, vmem_limit)
    grid = (m // tile_m, kdim // tk)
    return pl.pallas_call(
        _mm_kernel,
        out_shape=jax.ShapeDtypeStruct((m, n_out), out_dtype),
        grid_spec=pltpu.PrefetchScalarGridSpec(
            num_scalar_prefetch=0,
            grid=grid,
            in_specs=[
                pl.BlockSpec((tile_m, tk), lambda i, k: (i, k)),
                pl.BlockSpec((tk, n_out), lambda i, k: (k, 0)),
            ],
            out_specs=pl.BlockSpec((tile_m, n_out), lambda i, k: (i, 0)),
            scratch_shapes=[pltpu.VMEM((tile_m, n_out), jnp.float32)],
        ),
        compiler_params=_cparams(vmem_limit),
    )(a, b)


def _tiled_mm_bias(a, b, bias, *, out_dtype, tile_m, vmem_limit):
    m, kdim = a.shape
    _, n_out = b.shape
    tk = _pick_tile_k(kdim, tile_m, n_out, vmem_limit)
    grid = (m // tile_m, kdim // tk)
    return pl.pallas_call(
        _mm_bias_kernel,
        out_shape=jax.ShapeDtypeStruct((m, n_out), out_dtype),
        grid_spec=pltpu.PrefetchScalarGridSpec(
            num_scalar_prefetch=0,
            grid=grid,
            in_specs=[
                pl.BlockSpec((tile_m, tk), lambda i, k: (i, k)),
                pl.BlockSpec((tk, n_out), lambda i, k: (k, 0)),
                pl.BlockSpec((1, n_out), lambda i, k: (0, 0)),
            ],
            out_specs=pl.BlockSpec((tile_m, n_out), lambda i, k: (i, 0)),
            scratch_shapes=[pltpu.VMEM((tile_m, n_out), jnp.float32)],
        ),
        compiler_params=_cparams(vmem_limit),
    )(a, b, bias)


def _tiled_mm_stats(a, b, *, out_dtype, tile_m, vmem_limit):
    m, kdim = a.shape
    _, n_out = b.shape
    tk = _pick_tile_k(kdim, tile_m, n_out, vmem_limit)
    m_tiles = m // tile_m
    grid = (m_tiles, kdim // tk)
    return pl.pallas_call(
        _mm_stats_kernel,
        out_shape=(jax.ShapeDtypeStruct((m, n_out), out_dtype),
                   jax.ShapeDtypeStruct((m_tiles * 8, n_out), jnp.float32)),
        grid_spec=pltpu.PrefetchScalarGridSpec(
            num_scalar_prefetch=0,
            grid=grid,
            in_specs=[
                pl.BlockSpec((tile_m, tk), lambda i, k: (i, k)),
                pl.BlockSpec((tk, n_out), lambda i, k: (k, 0)),
            ],
            out_specs=[
                pl.BlockSpec((tile_m, n_out), lambda i, k: (i, 0)),
                pl.BlockSpec((8, n_out), lambda i, k: (i, 0)),
            ],
            scratch_shapes=[pltpu.VMEM((tile_m, n_out), jnp.float32)],
        ),
        compiler_params=_cparams(vmem_limit),
    )(a, b)


def _tiled_bn_act_mm(h, stats, gamma, beta, w, alpha, *, n_valid, out_dtype,
                     tile_m, vmem_limit):
    m, kdim = h.shape
    _, n_out = w.shape
    m_tiles = m // tile_m
    stat_rows = stats.shape[0]
    tk = _pick_tile_k(kdim, tile_m, n_out, vmem_limit,
                      extra_col_bytes=(stat_rows + 2) * 4)
    grid = (m_tiles, kdim // tk)
    kern = functools.partial(_bn_act_mm_kernel, 1.0 / float(n_valid), 1e-5)
    return pl.pallas_call(
        kern,
        out_shape=jax.ShapeDtypeStruct((m, n_out), out_dtype),
        grid_spec=pltpu.PrefetchScalarGridSpec(
            num_scalar_prefetch=0,
            grid=grid,
            in_specs=[
                pl.BlockSpec((tile_m, tk), lambda i, k: (i, k)),      # h1 (bf16)
                pl.BlockSpec((stat_rows, tk), lambda i, k: (0, k)),   # per-tile stats
                pl.BlockSpec((1, tk), lambda i, k: (0, k)),           # gamma
                pl.BlockSpec((1, tk), lambda i, k: (0, k)),           # beta
                pl.BlockSpec((tk, n_out), lambda i, k: (k, 0)),       # W2
                pl.BlockSpec((1, 1), lambda i, k: (0, 0)),            # PReLU alpha
            ],
            out_specs=pl.BlockSpec((tile_m, n_out), lambda i, k: (i, 0)),
            scratch_shapes=[pltpu.VMEM((tile_m, n_out), jnp.float32)],
        ),
        compiler_params=_cparams(vmem_limit),
    )(h, stats, gamma, beta, w, alpha)


# ---------------------------------------------------------------------------
# GCNEncoder forward
# ---------------------------------------------------------------------------
def gcn_encoder_forward(a_hat, x, params, *, use_bf16=True):
    n, in_dim = x.shape
    hidden = params["w1"].shape[1]
    out_dim = params["w2"].shape[1]

    vmem_limit = _vmem_limit_bytes()

    n_p = _round_up(n, 256)
    tile_m = _pick_tile_m(n_p)
    fin_p = _round_up(in_dim, 128)
    hid_p = _round_up(hidden, 128)
    out_p = _round_up(out_dim, 128)

    # bf16 MXU inputs (f32 accumulation) for v6e/v7x throughput; intermediates in bf16
    # to halve HBM traffic of the (N x hid) tensor.
    cdt = jnp.bfloat16 if use_bf16 else jnp.float32

    a_p = _pad2(a_hat, n_p, n_p).astype(cdt)
    x_p = _pad2(x, n_p, fin_p).astype(cdt)
    w1_p = _pad2(params["w1"], fin_p, hid_p).astype(cdt)
    w2_p = _pad2(params["w2"], hid_p, out_p).astype(cdt)
    b2_p = _pad1(params["b2"], out_p)[None, :].astype(jnp.float32)
    gamma_p = _pad1(params["gamma"], hid_p)[None, :].astype(jnp.float32)
    beta_p = _pad1(params["beta"], hid_p)[None, :].astype(jnp.float32)
    alpha = params["alpha"].reshape(1, 1).astype(jnp.float32)
    # params["b1"] is intentionally unused: the conv1 bias cancels exactly under
    # training-mode BatchNorm (it only affects running stats, which we don't emit).

    # ---- GCNConv 1: H1 = A_hat @ X @ W1 (association chosen statically), plus
    #      per-row-tile column sums / sums-of-squares for one-pass BatchNorm. ----
    if fin_p <= hid_p:
        t = _tiled_mm(a_p, x_p, out_dtype=cdt, tile_m=tile_m, vmem_limit=vmem_limit)
        h1, stats = _tiled_mm_stats(t, w1_p, out_dtype=cdt, tile_m=tile_m,
                                    vmem_limit=vmem_limit)
    else:
        t = _tiled_mm(x_p, w1_p, out_dtype=cdt, tile_m=tile_m, vmem_limit=vmem_limit)
        h1, stats = _tiled_mm_stats(a_p, t, out_dtype=cdt, tile_m=tile_m,
                                    vmem_limit=vmem_limit)

    # ---- Fused BatchNorm1d (training-mode batch stats, biased var, eps=1e-5)
    #      + PReLU + (H @ W2); stats reduction and gamma/beta fold happen in-kernel. ----
    hw2 = _tiled_bn_act_mm(h1, stats, gamma_p, beta_p, w2_p, alpha, n_valid=n,
                           out_dtype=cdt, tile_m=tile_m, vmem_limit=vmem_limit)

    # ---- GCNConv 2 aggregation: out = A_hat @ (.) + b2. ----
    out = _tiled_mm_bias(a_p, hw2, b2_p, out_dtype=jnp.float32, tile_m=tile_m,
                         vmem_limit=vmem_limit)
    return out[:n, :out_dim]


def gcn_encoder_reference(a_hat, x, params):
    """Pure-JAX reference (same semantics, f32)."""
    h = a_hat @ (x @ params["w1"]) + params["b1"]
    mean = h.mean(axis=0)
    var = ((h - mean) ** 2).mean(axis=0)
    h = (h - mean) * jax.lax.rsqrt(var + 1e-5) * params["gamma"] + params["beta"]
    h = jnp.where(h > 0, h, params["alpha"] * h)
    return a_hat @ (h @ params["w2"]) + params["b2"]


def build_normalized_adjacency(edge_index, num_nodes):
    """Dense A_hat = D^-1/2 (A + I) D^-1/2 with A[target, source] = 1 (PyG convention)."""
    src = edge_index[0]
    dst = edge_index[1]
    a = jnp.zeros((num_nodes, num_nodes), dtype=jnp.float32)
    a = a.at[dst, src].set(1.0)
    a = a + jnp.eye(num_nodes, dtype=jnp.float32)          # self-loops
    deg = jnp.sum(a, axis=1)
    d_inv_sqrt = jax.lax.rsqrt(deg)
    return d_inv_sqrt[:, None] * a * d_inv_sqrt[None, :]


def init_params(key, in_dim, out_dim):
    hidden = 2 * out_dim
    k1, k2 = jax.random.split(key)

    def glorot(k, fan_in, fan_out):
        limit = jnp.sqrt(6.0 / (fan_in + fan_out))
        return jax.random.uniform(k, (fan_in, fan_out), jnp.float32, -limit, limit)

    return {
        "w1": glorot(k1, in_dim, hidden),
        "b1": jnp.zeros((hidden,), jnp.float32),
        "gamma": jnp.ones((hidden,), jnp.float32),
        "beta": jnp.zeros((hidden,), jnp.float32),
        "alpha": jnp.array(0.25, jnp.float32),              # PReLU default
        "w2": glorot(k2, hidden, out_dim),
        "b2": jnp.zeros((out_dim,), jnp.float32),
    }


if __name__ == "__main__":
    key = jax.random.PRNGKey(0)
    kx, kp = jax.random.split(key)

    num_nodes, in_dim, out_dim = 300, 32, 16   # -> padded N=512, 2 row tiles of 256

    x = jax.random.normal(kx, (num_nodes, in_dim), dtype=jnp.float32)

    # Deterministic small graph: bidirectional ring + skip-3 chords.
    idx = jnp.arange(num_nodes, dtype=jnp.int32)
    nbr1 = (idx + 1) % num_nodes
    nbr3 = (idx + 3) % num_nodes
    edge_index = jnp.stack([
        jnp.concatenate([idx, nbr1, idx, nbr3]),
        jnp.concatenate([nbr1, idx, nbr3, idx]),
    ], axis=0)

    params = init_params(kp, in_dim, out_dim)
    a_hat = build_normalized_adjacency(edge_index, num_nodes)

    out = gcn_encoder_forward(a_hat, x, params)
    jax.block_until_ready(out)
    assert out.shape == (num_nodes, out_dim)

    ref = gcn_encoder_reference(a_hat, x, params)
    max_err = float(jnp.max(jnp.abs(out - ref)))
    ref_scale = float(jnp.max(jnp.abs(ref))) + 1e-6
    assert max_err <= 0.05 * ref_scale + 0.05, (
        f"mismatch vs reference: max_err={max_err}, ref_scale={ref_scale}")

    print("KERNEL_OK")
</pallas_src>

<mosaic_0001>
module attributes {stable_mosaic.version = 11 : i64} {
  func.func @_mm_kernel(%arg0: i32, %arg1: i32, %arg2: memref<256x512xbf16, #tpu.memory_space<vmem>>, %arg3: memref<512x128xbf16, #tpu.memory_space<vmem>>, %arg4: memref<256x128xbf16, #tpu.memory_space<vmem>>, %arg5: memref<256x128xf32, #tpu.memory_space<vmem>>) attributes {dimension_semantics = [#tpu.dimension_semantics<parallel>, #tpu.dimension_semantics<arbitrary>], iteration_bounds = array<i64: 2, 1>, scalar_prefetch = 0 : i64, scratch_operands = 1 : i64, tpu.core_type = #tpu.core_type<tc>, window_params = [{transform_indices = @transform_0, window_bounds = array<i64: 256, 512>}, {transform_indices = @transform_1, window_bounds = array<i64: 512, 128>}, {transform_indices = @transform_2, window_bounds = array<i64: 256, 128>}]} {
    %c0_i32 = arith.constant 0 : i32
    %0 = arith.cmpi eq, %arg1, %c0_i32 : i32
    %1 = arith.extui %0 : i1 to i32
    %c0_i32_0 = arith.constant 0 : i32
    %2 = arith.cmpi ne, %1, %c0_i32_0 : i32
    scf.if %2 {
      %cst_10 = arith.constant 0.000000e+00 : f32
      %12 = vector.broadcast %cst_10 : f32 to vector<256x128xf32>
      %c0_11 = arith.constant 0 : index
      %c0_12 = arith.constant 0 : index
      %13 = vector.load %arg5[%c0_11, %c0_12] : memref<256x128xf32, #tpu.memory_space<vmem>>, vector<256x128xf32>
      tpu.vector_store %arg5[%c0_11, %c0_12], %12 {strides = array<i32>} : memref<256x128xf32, #tpu.memory_space<vmem>>, vector<256x128xf32>,
    } else {
    }
    %c0 = arith.constant 0 : index
    %c0_1 = arith.constant 0 : index
    %3 = vector.load %arg5[%c0, %c0_1] : memref<256x128xf32, #tpu.memory_space<vmem>>, vector<256x128xf32>
    %c0_2 = arith.constant 0 : index
    %c0_3 = arith.constant 0 : index
    %4 = vector.load %arg2[%c0_2, %c0_3] : memref<256x512xbf16, #tpu.memory_space<vmem>>, vector<256x512xbf16>
    %c0_4 = arith.constant 0 : index
    %c0_5 = arith.constant 0 : index
    %5 = vector.load %arg3[%c0_4, %c0_5] : memref<512x128xbf16, #tpu.memory_space<vmem>>, vector<512x128xbf16>
    %cst = arith.constant dense<0.000000e+00> : vector<256x128xf32>
    %6 = tpu.matmul %4, %5, %cst {dimension_numbers = #tpu.dot_dimension_numbers<[1], [0], [0], [1], [0, 0, 1, 1], [], []>} : vector<256x512xbf16>, vector<512x128xbf16>, vector<256x128xf32> -> vector<256x128xf32>
    %7 = arith.addf %3, %6 : vector<256x128xf32>
    %c0_6 = arith.constant 0 : index
    %c0_7 = arith.constant 0 : index
    %8 = vector.load %arg5[%c0_6, %c0_7] : memref<256x128xf32, #tpu.memory_space<vmem>>, vector<256x128xf32>
    tpu.vector_store %arg5[%c0_6, %c0_7], %7 {strides = array<i32>} : memref<256x128xf32, #tpu.memory_space<vmem>>, vector<256x128xf32>,
    %c0_i32_8 = arith.constant 0 : i32
    %9 = arith.cmpi eq, %arg1, %c0_i32_8 : i32
    %10 = arith.extui %9 : i1 to i32
    %c0_i32_9 = arith.constant 0 : i32
    %11 = arith.cmpi ne, %10, %c0_i32_9 : i32
    scf.if %11 {
      %c0_10 = arith.constant 0 : index
      %c0_11 = arith.constant 0 : index
      %12 = vector.load %arg5[%c0_10, %c0_11] : memref<256x128xf32, #tpu.memory_space<vmem>>, vector<256x128xf32>
      %13 = arith.truncf %12 : vector<256x128xf32> to vector<256x128xbf16>
      %c0_12 = arith.constant 0 : index
      %c0_13 = arith.constant 0 : index
      %14 = vector.load %arg4[%c0_12, %c0_13] : memref<256x128xbf16, #tpu.memory_space<vmem>>, vector<256x128xbf16>
      tpu.vector_store %arg4[%c0_12, %c0_13], %13 {strides = array<i32>} : memref<256x128xbf16, #tpu.memory_space<vmem>>, vector<256x128xbf16>,
    } else {
    }
    return
  }
  func.func @transform_0(%arg0: i32, %arg1: i32) -> (i32, i32) {
    %c0_i32 = arith.constant 0 : i32
    return %arg0, %arg1 : i32, i32
  }
  func.func @transform_1(%arg0: i32, %arg1: i32) -> (i32, i32) {
    %c0_i32 = arith.constant 0 : i32
    %c0_i32_0 = arith.constant 0 : i32
    return %arg1, %c0_i32 : i32, i32
  }
  func.func @transform_2(%arg0: i32, %arg1: i32) -> (i32, i32) {
    %c0_i32 = arith.constant 0 : i32
    %c0_i32_0 = arith.constant 0 : i32
    return %arg0, %c0_i32 : i32, i32
  }
}

</mosaic_0001>

<llo_original>
// kernel: tpu_custom_call.1
$region0: #{tpu_custom_call.1}
  #allocation0 [shape = 'u32[]', space=smem, size = 0x4, offset = 0x4, fixed_abs, tag = 'smem constant byte address 0x4 - core index']
  #allocation1 [shape = 'u32[72,128]{1,0:T(1,128)}', space=vmem, size = 0x9000, scoped, tag = 'internal scratch']
  #allocation2 [shape = 'f32[256,128]{1,0:T(8,128)}', space=vmem, size = 0x20000, scoped, tag = 'scratch operand']
  %s0 = inlined_call_operand.hbm [shape: bf16[512,512], index: 0, kind: input, shape index: {}]
  %s1 = inlined_call_operand.hbm [shape: bf16[512,128], index: 1, kind: input, shape index: {}]
  %s2 = inlined_call_operand.hbm [shape: bf16[512,128], index: 2, kind: output, shape index: {}]
  %s3 = sld [smem:[#allocation0]]
  $region57: #{tpu_custom_call.1} parent=0
    _
  %s5 = ssub.s32 1, %s3
  %s6 = scalar_select 0, %s5, %s3
  $region1: #{tpu_custom_call.1} parent=0
    #allocation3 [shape = 'u8[524288]{0}', space=vmem, size = 0x80000, scoped, tag = 'input window, operand 0']
    #allocation4 [shape = 's32[2]{0}', space=sflag, size = 0x8, scoped, tag = 'scoped memory for tpu_custom_call.1']
    #allocation5 [shape = 's32[2]{0}', space=sflag, size = 0x8, scoped, tag = 'scoped memory for tpu_custom_call.1']
    #allocation6 [shape = 'u8[131072]{0}', space=vmem, size = 0x20000, scoped, tag = 'input window, operand 1, single buffered']
    #allocation7 [shape = 's32[1]{0}', space=sflag, size = 0x4, scoped, tag = 'scoped memory for tpu_custom_call.1']
    #allocation8 [shape = 'u8[131072]{0}', space=vmem, size = 0x20000, scoped, tag = 'output window, operand 0']
    %7 = vsyncpa [#allocation4], 0
    %s8 = scalar_lea.sflag [#allocation4], 1
    %9 = vsyncpa %s8, 0
    %10 = vsyncpa [#allocation7], 0
    %11 = vsyncpa [#allocation5], 0
    %s12 = scalar_lea.sflag [#allocation5], 1
    %13 = vsyncpa %s12, 0
    loop: start=0, step=1, limit=4
    $region2: #{tpu_custom_call.1} parent=1 // loop_pre_header
      _
    $region3: #{tpu_custom_call.1} parent=1 // loop_header
      %s15 = sphi 0, %s19
      %p16 = scmp.ge.s32.totalorder %s15, 4
      %s22 = sphi 0, %s34
      %s23 = sphi 0, %s30
      %s24 = sphi 0, %s22
      %s25 = sphi 0, %s23
      %s26 = sphi 0, %s24
      %s27 = sphi 0, %s25
      %s39 = sphi 0, %s41
      %s42 = sphi 0, %s39
      %s43 = sphi 0, %s42
      %s59 = sphi 0, %s43
      %s65 = sphi 0, %s67
      %s68 = sphi 0, %s65
      %s69 = sphi 0, %s68
      %s85 = sphi 0, %s69
      %s91 = sphi 0, %s93
      %s94 = sphi 0, %s91
      %s95 = sphi 0, %s94
      %s111 = sphi 0, %s95
    $region4: #{tpu_custom_call.1} parent=1 // loop_header_branch
      %18 = sbr.rel (%p16) target = $region8
    $region5: #{tpu_custom_call.1} parent=1 // loop_body
      %s20 = ssub.s32 %s15, 1
      %s21 = ssub.s32 %s15, 2
      %s28 = sadd.s32 1, %s23
      %p29 = scmp.ge.s32.totalorder %s28, 1
      %s30 = scalar_select %p29, 0, %s28
      %s31 = sadd.s32 1, %s22
      %s32 = scalar_select %p29, %s31, %s22
      %p33 = scmp.ge.s32.totalorder %s32, 2
      %s34 = scalar_select %p33, 0, %s32
      %s35 = ssub.s32 %s22, %s34
      %s36 = ssub.s32 %s23, %s30
      %s37 = sor.u32 %s35, %s36
      %p38 = scmp.eq.s32.totalorder %s37, 0
      %s40 = sadd.s32 %s39, 1
      %s41 = scalar_select %p38, %s39, %s40
      %p44 = pneg %p38
      %p45 = scmp.eq.s32.totalorder %s15, 1
      %p46 = por %p44, %p45
      %p47 = scmp.ne.s32.totalorder %s39, %s42
      %p48 = scmp.eq.s32.totalorder %s15, 0
      %p49 = por %p47, %p48
      %p50 = scmp.ne.s32.totalorder %s39, %s42
      %p51 = scmp.eq.s32.totalorder %s20, 1
      %p52 = por %p50, %p51
      %p53 = scmp.ne.s32.totalorder %s42, %s43
      %p54 = scmp.eq.s32.totalorder %s20, 0
      %p55 = por %p53, %p54
      %p56 = scmp.ne.s32.totalorder %s42, %s43
      %p57 = scmp.eq.s32.totalorder %s21, 1
      %p58 = por %p56, %p57
      %p60 = scmp.ne.s32.totalorder %s43, %s59
      %p61 = scmp.eq.s32.totalorder %s21, 0
      %p62 = por %p60, %p61
      %s63 = ssub.s32 %s23, %s30
      %p64 = scmp.eq.s32.totalorder %s63, 0
      %s66 = sadd.s32 %s65, 1
      %s67 = scalar_select %p64, %s65, %s66
      %p70 = pneg %p64
      %p71 = scmp.eq.s32.totalorder %s15, 1
      %p72 = por %p70, %p71
      %p73 = scmp.ne.s32.totalorder %s65, %s68
      %p74 = scmp.eq.s32.totalorder %s15, 0
      %p75 = por %p73, %p74
      %p76 = scmp.ne.s32.totalorder %s65, %s68
      %p77 = scmp.eq.s32.totalorder %s20, 1
      %p78 = por %p76, %p77
      %p79 = scmp.ne.s32.totalorder %s68, %s69
      %p80 = scmp.eq.s32.totalorder %s20, 0
      %p81 = por %p79, %p80
      %p82 = scmp.ne.s32.totalorder %s68, %s69
      %p83 = scmp.eq.s32.totalorder %s21, 1
      %p84 = por %p82, %p83
      %p86 = scmp.ne.s32.totalorder %s69, %s85
      %p87 = scmp.eq.s32.totalorder %s21, 0
      %p88 = por %p86, %p87
      %s89 = ssub.s32 %s22, %s34
      %p90 = scmp.eq.s32.totalorder %s89, 0
      %s92 = sadd.s32 %s91, 1
      %s93 = scalar_select %p90, %s91, %s92
      %p96 = pneg %p90
      %p97 = scmp.eq.s32.totalorder %s15, 1
      %p98 = por %p96, %p97
      %p99 = scmp.ne.s32.totalorder %s91, %s94
      %p100 = scmp.eq.s32.totalorder %s15, 0
      %p101 = por %p99, %p100
      %p102 = scmp.ne.s32.totalorder %s91, %s94
      %p103 = scmp.eq.s32.totalorder %s20, 1
      %p104 = por %p102, %p103
      %p105 = scmp.ne.s32.totalorder %s94, %s95
      %p106 = scmp.eq.s32.totalorder %s20, 0
      %p107 = por %p105, %p106
      %p108 = scmp.ne.s32.totalorder %s94, %s95
      %p109 = scmp.eq.s32.totalorder %s21, 1
      %p110 = por %p108, %p109
      %p112 = scmp.ne.s32.totalorder %s95, %s111
      %p113 = scmp.eq.s32.totalorder %s21, 0
      %p114 = por %p112, %p113
      %p115 = scmp.le.s32.totalorder 1, %s15
      %p116 = scmp.lt.s32.totalorder %s15, 3
      %p117 = pnand %p115, %p116
      %p118 = pneg %p117
      // Predicated region
      $region9: #{tpu_custom_call.1} parent=5 // pred_check
        _
      $region10: #{tpu_custom_call.1} parent=5 // pred_check_branch
        %120 = sbr.rel (%p117) target = $region12
      $region11: #{tpu_custom_call.1} parent=5 // pred_region
        %s121 = ssub.s32 %s15, 1
        // Predicated region
        $region13: #{tpu_custom_call.1} parent=11 // pred_check
          %p122 = pneg %p81
        $region14: #{tpu_custom_call.1} parent=11 // pred_check_branch
          %124 = sbr.rel (%p122) target = $region16
        $region15: #{tpu_custom_call.1} parent=11 // pred_region
          %s125 = smul.u32 64, %s25
          %127 = vsyncadd [#allocation7], 0
          %s128 = smul.addr %s125, 4
          %s129 = scalar_lea.hbm %s1, %s128
          %s130 = sshll.u32 %s129, 4
          %s131 = int_to_ptr.hbm [resolvable:$true] %s130
          %s132 = sshll.u32 [#allocation6], 4
          %s133 = int_to_ptr.vmem [resolvable:$true] %s132
          %138 = dma.hbm_to_vmem [thread:$0]  %s131, 4096, %s133, [#allocation7], 64, 64, 4
        $region16: #{tpu_custom_call.1} parent=11 // pred_fallthru
          _
      $region12: #{tpu_custom_call.1} parent=5 // pred_fallthru
        _
      %p139 = scmp.lt.s32.totalorder %s15, 2
      // Predicated region
      $region17: #{tpu_custom_call.1} parent=5 // pred_check
        %p140 = pneg %p139
      $region18: #{tpu_custom_call.1} parent=5 // pred_check_branch
        %142 = sbr.rel (%p140) target = $region20
      $region19: #{tpu_custom_call.1} parent=5 // pred_region
        // Predicated region
        $region21: #{tpu_custom_call.1} parent=19 // pred_check
          %p143 = pneg %p49
        $region22: #{tpu_custom_call.1} parent=19 // pred_check_branch
          %145 = sbr.rel (%p143) target = $region24
        $region23: #{tpu_custom_call.1} parent=19 // pred_region
          %s146 = sand.u32 %s39, 1
          %s147 = scalar_lea.sflag [#allocation4], %s146
          %s148 = sand.u32 %s39, 1
          %s149 = smul.addr %s148, 512
          %s150 = scalar_lea.vmem [#allocation3], %s149
          %s151 = smul.u32 32, %s22
          %s152 = smul.u32 4, %s23
          %154 = vsyncadd %s147, 0
          %s155 = smul.addr %s151, 4
          %s156 = sadd.s32 %s152, %s155
          %s157 = smul.addr %s156, 4
          %s158 = scalar_lea.hbm %s0, %s157
          %s159 = sshll.u32 %s158, 4
          %s160 = int_to_ptr.hbm [resolvable:$true] %s159
          %s161 = sshll.u32 %s150, 4
          %s162 = int_to_ptr.vmem [resolvable:$true] %s161
          %167 = dma.hbm_to_vmem [thread:$0]  %s160, 8192, %s162, %s147, 256, 256, 16
        $region24: #{tpu_custom_call.1} parent=19 // pred_fallthru
          _
      $region20: #{tpu_custom_call.1} parent=5 // pred_fallthru
        _
      %p168 = scmp.le.s32.totalorder 1, %s15
      %p169 = scmp.lt.s32.totalorder %s15, 3
      %p170 = pnand %p168, %p169
      %p171 = pneg %p170
      // Predicated region
      $region25: #{tpu_custom_call.1} parent=5 // pred_check
        _
      $region26: #{tpu_custom_call.1} parent=5 // pred_check_branch
        %173 = sbr.rel (%p170) target = $region28
      $region27: #{tpu_custom_call.1} parent=5 // pred_region
        %s174 = ssub.s32 %s15, 1
        %s175 = sand.u32 %s42, 1
        %s176 = scalar_lea.sflag [#allocation4], %s175
        %s177 = sand.u32 %s42, 1
        %s178 = smul.addr %s177, 512
        %s179 = scalar_lea.vmem [#allocation3], %s178
        // Predicated region
        $region29: #{tpu_custom_call.1} parent=27 // pred_check
          %p180 = pneg %p55
        $region30: #{tpu_custom_call.1} parent=27 // pred_check_branch
          %182 = sbr.rel (%p180) target = $region32
        $region31: #{tpu_custom_call.1} parent=27 // pred_region
          %184 = dma.done %s176, 8192
        $region32: #{tpu_custom_call.1} parent=27 // pred_fallthru
          _
        // Predicated region
        $region33: #{tpu_custom_call.1} parent=27 // pred_check
          %p185 = pneg %p81
        $region34: #{tpu_custom_call.1} parent=27 // pred_check_branch
          %187 = sbr.rel (%p185) target = $region36
        $region35: #{tpu_custom_call.1} parent=27 // pred_region
          %189 = dma.done [#allocation7], 4096
        $region36: #{tpu_custom_call.1} parent=27 // pred_fallthru
          _
        %s190 = sand.u32 %s42, 1
        %s191 = scalar_lea.sflag [#allocation4], %s190
        %s192 = sand.u32 %s42, 1
        %s193 = smul.addr %s192, 512
        %s194 = scalar_lea.vmem [#allocation3], %s193
        %p195 = pneg %p55
        %p196 = pneg %p52
        %p197 = pneg %p81
        %p198 = pneg %p78
        %p199 = pneg %p107
        %p200 = pneg %p104
        %s201 = sand.u32 %s94, 1
        %s202 = scalar_lea.sflag [#allocation5], %s201
        %s203 = sand.u32 %s94, 1
        %s204 = smul.addr %s203, 128
        %s205 = scalar_lea.vmem [#allocation8], %s204
        %s206 = smul.u32 32, %s24
        %s207 = smul.u32 4, %s25
        %s208 = smul.u32 64, %s25
        %s209 = smul.u32 32, %s24
        %p210 = scmp.eq.s32.totalorder %s25, 0
        // Predicated region
        $region37: #{tpu_custom_call.1} parent=27 // pred_check
          %p211 = pneg %p210
        $region38: #{tpu_custom_call.1} parent=27 // pred_check_branch
          %213 = sbr.rel (%p211) target = $region40
        $region39: #{tpu_custom_call.1} parent=27 // pred_region
          %214 = vst [vmem:[#allocation2] sm:$0xff] 0.0
          %215 = vst [vmem:[#allocation2 + $0x8] sm:$0xff] 0.0
          %216 = vst [vmem:[#allocation2 + $0x10] sm:$0xff] 0.0
          %217 = vst [vmem:[#allocation2 + $0x18] sm:$0xff] 0.0
          %218 = vst [vmem:[#allocation2 + $0x20] sm:$0xff] 0.0
          %219 = vst [vmem:[#allocation2 + $0x28] sm:$0xff] 0.0
          %220 = vst [vmem:[#allocation2 + $0x30] sm:$0xff] 0.0
          %221 = vst [vmem:[#allocation2 + $0x38] sm:$0xff] 0.0
          %222 = vst [vmem:[#allocation2 + $0x40] sm:$0xff] 0.0
          %223 = vst [vmem:[#allocation2 + $0x48] sm:$0xff] 0.0
          %224 = vst [vmem:[#allocation2 + $0x50] sm:$0xff] 0.0
          %225 = vst [vmem:[#allocation2 + $0x58] sm:$0xff] 0.0
          %226 = vst [vmem:[#allocation2 + $0x60] sm:$0xff] 0.0
          %227 = vst [vmem:[#allocation2 + $0x68] sm:$0xff] 0.0
          %228 = vst [vmem:[#allocation2 + $0x70] sm:$0xff] 0.0
          %229 = vst [vmem:[#allocation2 + $0x78] sm:$0xff] 0.0
          %230 = vst [vmem:[#allocation2 + $0x80] sm:$0xff] 0.0
          %231 = vst [vmem:[#allocation2 + $0x88] sm:$0xff] 0.0
          %232 = vst [vmem:[#allocation2 + $0x90] sm:$0xff] 0.0
          %233 = vst [vmem:[#allocation2 + $0x98] sm:$0xff] 0.0
          %234 = vst [vmem:[#allocation2 + $0xa0] sm:$0xff] 0.0
          %235 = vst [vmem:[#allocation2 + $0xa8] sm:$0xff] 0.0
          %236 = vst [vmem:[#allocation2 + $0xb0] sm:$0xff] 0.0
          %237 = vst [vmem:[#allocation2 + $0xb8] sm:$0xff] 0.0
          %238 = vst [vmem:[#allocation2 + $0xc0] sm:$0xff] 0.0
          %239 = vst [vmem:[#allocation2 + $0xc8] sm:$0xff] 0.0
          %240 = vst [vmem:[#allocation2 + $0xd0] sm:$0xff] 0.0
          %241 = vst [vmem:[#allocation2 + $0xd8] sm:$0xff] 0.0
          %242 = vst [vmem:[#allocation2 + $0xe0] sm:$0xff] 0.0
          %243 = vst [vmem:[#allocation2 + $0xe8] sm:$0xff] 0.0
          %244 = vst [vmem:[#allocation2 + $0xf0] sm:$0xff] 0.0
          %245 = vst [vmem:[#allocation2 + $0xf8] sm:$0xff] 0.0
        $region40: #{tpu_custom_call.1} parent=27 // pred_fallthru
          _
        %v246 = vld [vmem:[#allocation2] sm:$0xff]
        %v247 = vld [vmem:[#allocation2 + $0x8] sm:$0xff]
        %v248 = vld [vmem:[#allocation2 + $0x10] sm:$0xff]
        %v249 = vld [vmem:[#allocation2 + $0x18] sm:$0xff]
        %v250 = vld [vmem:[#allocation2 + $0x20] sm:$0xff]
        %v251 = vld [vmem:[#allocation2 + $0x28] sm:$0xff]
        %v252 = vld [vmem:[#allocation2 + $0x30] sm:$0xff]
        %v253 = vld [vmem:[#allocation2 + $0x38] sm:$0xff]
        %v254 = vld [vmem:[#allocation2 + $0x40] sm:$0xff]
        %v255 = vld [vmem:[#allocation2 + $0x48] sm:$0xff]
        %v256 = vld [vmem:[#allocation2 + $0x50] sm:$0xff]
        %v257 = vld [vmem:[#allocation2 + $0x58] sm:$0xff]
        %v258 = vld [vmem:[#allocation2 + $0x60] sm:$0xff]
        %v259 = vld [vmem:[#allocation2 + $0x68] sm:$0xff]
        %v260 = vld [vmem:[#allocation2 + $0x70] sm:$0xff]
        %v261 = vld [vmem:[#allocation2 + $0x78] sm:$0xff]
        %v262 = vld [vmem:[#allocation2 + $0x80] sm:$0xff]
        %v263 = vld [vmem:[#allocation2 + $0x88] sm:$0xff]
        %v264 = vld [vmem:[#allocation2 + $0x90] sm:$0xff]
        %v265 = vld [vmem:[#allocation2 + $0x98] sm:$0xff]
        %v266 = vld [vmem:[#allocation2 + $0xa0] sm:$0xff]
        %v267 = vld [vmem:[#allocation2 + $0xa8] sm:$0xff]
        %v268 = vld [vmem:[#allocation2 + $0xb0] sm:$0xff]
        %v269 = vld [vmem:[#allocation2 + $0xb8] sm:$0xff]
        %v270 = vld [vmem:[#allocation2 + $0xc0] sm:$0xff]
        %v271 = vld [vmem:[#allocation2 + $0xc8] sm:$0xff]
        %v272 = vld [vmem:[#allocation2 + $0xd0] sm:$0xff]
        %v273 = vld [vmem:[#allocation2 + $0xd8] sm:$0xff]
        %v274 = vld [vmem:[#allocation2 + $0xe0] sm:$0xff]
        %v275 = vld [vmem:[#allocation2 + $0xe8] sm:$0xff]
        %v276 = vld [vmem:[#allocation2 + $0xf0] sm:$0xff]
        %v277 = vld [vmem:[#allocation2 + $0xf8] sm:$0xff]
        %v278 = vld [vmem:[%s179] sm:$0xff]
        %v279 = vld [vmem:[%s179 + $0x8] sm:$0xff]
        %v280 = vld [vmem:[%s179 + $0x10] sm:$0xff]
        %v281 = vld [vmem:[%s179 + $0x18] sm:$0xff]
        %v282 = vld [vmem:[%s179 + $0x20] sm:$0xff]
        %v283 = vld [vmem:[%s179 + $0x28] sm:$0xff]
        %v284 = vld [vmem:[%s179 + $0x30] sm:$0xff]
        %v285 = vld [vmem:[%s179 + $0x38] sm:$0xff]
        %v286 = vld [vmem:[%s179 + $0x40] sm:$0xff]
        %v287 = vld [vmem:[%s179 + $0x48] sm:$0xff]
        %v288 = vld [vmem:[%s179 + $0x50] sm:$0xff]
        %v289 = vld [vmem:[%s179 + $0x58] sm:$0xff]
        %v290 = vld [vmem:[%s179 + $0x60] sm:$0xff]
        %v291 = vld [vmem:[%s179 + $0x68] sm:$0xff]
        %v292 = vld [vmem:[%s179 + $0x70] sm:$0xff]
        %v293 = vld [vmem:[%s179 + $0x78] sm:$0xff]
        %v294 = vld [vmem:[%s179 + $0x80] sm:$0xff]
        %v295 = vld [vmem:[%s179 + $0x88] sm:$0xff]
        %v296 = vld [vmem:[%s179 + $0x90] sm:$0xff]
        %v297 = vld [vmem:[%s179 + $0x98] sm:$0xff]
        %v298 = vld [vmem:[%s179 + $0xa0] sm:$0xff]
        %v299 = vld [vmem:[%s179 + $0xa8] sm:$0xff]
        %v300 = vld [vmem:[%s179 + $0xb0] sm:$0xff]
        %v301 = vld [vmem:[%s179 + $0xb8] sm:$0xff]
        %v302 = vld [vmem:[%s179 + $0xc0] sm:$0xff]
        %v303 = vld [vmem:[%s179 + $0xc8] sm:$0xff]
        %v304 = vld [vmem:[%s179 + $0xd0] sm:$0xff]
        %v305 = vld [vmem:[%s179 + $0xd8] sm:$0xff]
        %v306 = vld [vmem:[%s179 + $0xe0] sm:$0xff]
        %v307 = vld [vmem:[%s179 + $0xe8] sm:$0xff]
        %v308 = vld [vmem:[%s179 + $0xf0] sm:$0xff]
        %v309 = vld [vmem:[%s179 + $0xf8] sm:$0xff]
        %v310 = vld [vmem:[%s179 + $0x100] sm:$0xff]
        %v311 = vld [vmem:[%s179 + $0x108] sm:$0xff]
        %v312 = vld [vmem:[%s179 + $0x110] sm:$0xff]
        %v313 = vld [vmem:[%s179 + $0x118] sm:$0xff]
        %v314 = vld [vmem:[%s179 + $0x120] sm:$0xff]
        %v315 = vld [vmem:[%s179 + $0x128] sm:$0xff]
        %v316 = vld [vmem:[%s179 + $0x130] sm:$0xff]
        %v317 = vld [vmem:[%s179 + $0x138] sm:$0xff]
        %v318 = vld [vmem:[%s179 + $0x140] sm:$0xff]
        %v319 = vld [vmem:[%s179 + $0x148] sm:$0xff]
        %v320 = vld [vmem:[%s179 + $0x150] sm:$0xff]
        %v321 = vld [vmem:[%s179 + $0x158] sm:$0xff]
        %v322 = vld [vmem:[%s179 + $0x160] sm:$0xff]
        %v323 = vld [vmem:[%s179 + $0x168] sm:$0xff]
        %v324 = vld [vmem:[%s179 + $0x170] sm:$0xff]
        %v325 = vld [vmem:[%s179 + $0x178] sm:$0xff]
        %v326 = vld [vmem:[%s179 + $0x180] sm:$0xff]
        %v327 = vld [vmem:[%s179 + $0x188] sm:$0xff]
        %v328 = vld [vmem:[%s179 + $0x190] sm:$0xff]
        %v329 = vld [vmem:[%s179 + $0x198] sm:$0xff]
        %v330 = vld [vmem:[%s179 + $0x1a0] sm:$0xff]
        %v331 = vld [vmem:[%s179 + $0x1a8] sm:$0xff]
        %v332 = vld [vmem:[%s179 + $0x1b0] sm:$0xff]
        %v333 = vld [vmem:[%s179 + $0x1b8] sm:$0xff]
        %v334 = vld [vmem:[%s179 + $0x1c0] sm:$0xff]
        %v335 = vld [vmem:[%s179 + $0x1c8] sm:$0xff]
        %v336 = vld [vmem:[%s179 + $0x1d0] sm:$0xff]
        %v337 = vld [vmem:[%s179 + $0x1d8] sm:$0xff]
        %v338 = vld [vmem:[%s179 + $0x1e0] sm:$0xff]
        %v339 = vld [vmem:[%s179 + $0x1e8] sm:$0xff]
        %v340 = vld [vmem:[%s179 + $0x1f0] sm:$0xff]
        %v341 = vld [vmem:[%s179 + $0x1f8] sm:$0xff]
        %v342 = vld [vmem:[#allocation6] sm:$0xf]
        %v343 = vld [vmem:[#allocation6 + $0x4] sm:$0xf]
        %v344 = vld [vmem:[#allocation6 + $0x8] sm:$0xf]
        %v345 = vld [vmem:[#allocation6 + $0xc] sm:$0xf]
        %v346 = vld [vmem:[#allocation6 + $0x10] sm:$0xf]
        %v347 = vld [vmem:[#allocation6 + $0x14] sm:$0xf]
        %v348 = vld [vmem:[#allocation6 + $0x18] sm:$0xf]
        %v349 = vld [vmem:[#allocation6 + $0x1c] sm:$0xf]
        %v350 = vld [vmem:[#allocation6 + $0x20] sm:$0xf]
        %v351 = vld [vmem:[#allocation6 + $0x24] sm:$0xf]
        %v352 = vld [vmem:[#allocation6 + $0x28] sm:$0xf]
        %v353 = vld [vmem:[#allocation6 + $0x2c] sm:$0xf]
        %v354 = vld [vmem:[#allocation6 + $0x30] sm:$0xf]
        %v355 = vld [vmem:[#allocation6 + $0x34] sm:$0xf]
        %v356 = vld [vmem:[#allocation6 + $0x38] sm:$0xf]
        %v357 = vld [vmem:[#allocation6 + $0x3c] sm:$0xf]
        %v358 = vld [vmem:[#allocation6 + $0x40] sm:$0xf]
        %v359 = vld [vmem:[#allocation6 + $0x44] sm:$0xf]
        %v360 = vld [vmem:[#allocation6 + $0x48] sm:$0xf]
        %v361 = vld [vmem:[#allocation6 + $0x4c] sm:$0xf]
        %v362 = vld [vmem:[#allocation6 + $0x50] sm:$0xf]
        %v363 = vld [vmem:[#allocation6 + $0x54] sm:$0xf]
        %v364 = vld [vmem:[#allocation6 + $0x58] sm:$0xf]
        %v365 = vld [vmem:[#allocation6 + $0x5c] sm:$0xf]
        %v366 = vld [vmem:[#allocation6 + $0x60] sm:$0xf]
        %v367 = vld [vmem:[#allocation6 + $0x64] sm:$0xf]
        %v368 = vld [vmem:[#allocation6 + $0x68] sm:$0xf]
        %v369 = vld [vmem:[#allocation6 + $0x6c] sm:$0xf]
        %v370 = vld [vmem:[#allocation6 + $0x70] sm:$0xf]
        %v371 = vld [vmem:[#allocation6 + $0x74] sm:$0xf]
        %v372 = vld [vmem:[#allocation6 + $0x78] sm:$0xf]
        %v373 = vld [vmem:[#allocation6 + $0x7c] sm:$0xf]
        %v374 = vld [vmem:[#allocation6 + $0x80] sm:$0xf]
        %v375 = vld [vmem:[#allocation6 + $0x84] sm:$0xf]
        %v376 = vld [vmem:[#allocation6 + $0x88] sm:$0xf]
        %v377 = vld [vmem:[#allocation6 + $0x8c] sm:$0xf]
        %v378 = vld [vmem:[#allocation6 + $0x90] sm:$0xf]
        %v379 = vld [vmem:[#allocation6 + $0x94] sm:$0xf]
        %v380 = vld [vmem:[#allocation6 + $0x98] sm:$0xf]
        %v381 = vld [vmem:[#allocation6 + $0x9c] sm:$0xf]
        %v382 = vld [vmem:[#allocation6 + $0xa0] sm:$0xf]
        %v383 = vld [vmem:[#allocation6 + $0xa4] sm:$0xf]
        %v384 = vld [vmem:[#allocation6 + $0xa8] sm:$0xf]
        %v385 = vld [vmem:[#allocation6 + $0xac] sm:$0xf]
        %v386 = vld [vmem:[#allocation6 + $0xb0] sm:$0xf]
        %v387 = vld [vmem:[#allocation6 + $0xb4] sm:$0xf]
        %v388 = vld [vmem:[#allocation6 + $0xb8] sm:$0xf]
        %v389 = vld [vmem:[#allocation6 + $0xbc] sm:$0xf]
        %v390 = vld [vmem:[#allocation6 + $0xc0] sm:$0xf]
        %v391 = vld [vmem:[#allocation6 + $0xc4] sm:$0xf]
        %v392 = vld [vmem:[#allocation6 + $0xc8] sm:$0xf]
        %v393 = vld [vmem:[#allocation6 + $0xcc] sm:$0xf]
        %v394 = vld [vmem:[#allocation6 + $0xd0] sm:$0xf]
        %v395 = vld [vmem:[#allocation6 + $0xd4] sm:$0xf]
        %v396 = vld [vmem:[#allocation6 + $0xd8] sm:$0xf]
        %v397 = vld [vmem:[#allocation6 + $0xdc] sm:$0xf]
        %v398 = vld [vmem:[#allocation6 + $0xe0] sm:$0xf]
        %v399 = vld [vmem:[#allocation6 + $0xe4] sm:$0xf]
        %v400 = vld [vmem:[#allocation6 + $0xe8] sm:$0xf]
        %v401 = vld [vmem:[#allocation6 + $0xec] sm:$0xf]
        %v402 = vld [vmem:[#allocation6 + $0xf0] sm:$0xf]
        %v403 = vld [vmem:[#allocation6 + $0xf4] sm:$0xf]
        %v404 = vld [vmem:[#allocation6 + $0xf8] sm:$0xf]
        %v405 = vld [vmem:[#allocation6 + $0xfc] sm:$0xf]
        %v470 = vunpack.c.l.b16 %v278
        %v471 = vunpack.c.h.b16 %v278
        %v472 = vunpack.c.l.b16 %v279
        %v473 = vunpack.c.h.b16 %v279
        %v474 = vunpack.c.l.b16 %v280
        %v475 = vunpack.c.h.b16 %v280
        %v476 = vunpack.c.l.b16 %v281
        %v477 = vunpack.c.h.b16 %v281
        %v478 = vunpack.c.l.b16 %v282
        %v479 = vunpack.c.h.b16 %v282
        %v480 = vunpack.c.l.b16 %v283
        %v481 = vunpack.c.h.b16 %v283
        %v482 = vunpack.c.l.b16 %v284
        %v483 = vunpack.c.h.b16 %v284
        %v484 = vunpack.c.l.b16 %v285
        %v485 = vunpack.c.h.b16 %v285
        %v486 = vunpack.c.l.b16 %v286
        %v487 = vunpack.c.h.b16 %v286
        %v488 = vunpack.c.l.b16 %v287
        %v489 = vunpack.c.h.b16 %v287
        %v490 = vunpack.c.l.b16 %v288
        %v491 = vunpack.c.h.b16 %v288
        %v492 = vunpack.c.l.b16 %v289
        %v493 = vunpack.c.h.b16 %v289
        %v494 = vunpack.c.l.b16 %v290
        %v495 = vunpack.c.h.b16 %v290
        %v496 = vunpack.c.l.b16 %v291
        %v497 = vunpack.c.h.b16 %v291
        %v498 = vunpack.c.l.b16 %v292
        %v499 = vunpack.c.h.b16 %v292
        %v500 = vunpack.c.l.b16 %v293
        %v501 = vunpack.c.h.b16 %v293
        %v502 = vunpack.c.l.b16 %v294
        %v503 = vunpack.c.h.b16 %v294
        %v504 = vunpack.c.l.b16 %v295
        %v505 = vunpack.c.h.b16 %v295
        %v506 = vunpack.c.l.b16 %v296
        %v507 = vunpack.c.h.b16 %v296
        %v508 = vunpack.c.l.b16 %v297
        %v509 = vunpack.c.h.b16 %v297
        %v510 = vunpack.c.l.b16 %v298
        %v511 = vunpack.c.h.b16 %v298
        %v512 = vunpack.c.l.b16 %v299
        %v513 = vunpack.c.h.b16 %v299
        %v514 = vunpack.c.l.b16 %v300
        %v515 = vunpack.c.h.b16 %v300
        %v516 = vunpack.c.l.b16 %v301
        %v517 = vunpack.c.h.b16 %v301
        %v518 = vunpack.c.l.b16 %v302
        %v519 = vunpack.c.h.b16 %v302
        %v520 = vunpack.c.l.b16 %v303
        %v521 = vunpack.c.h.b16 %v303
        %v522 = vunpack.c.l.b16 %v304
        %v523 = vunpack.c.h.b16 %v304
        %v524 = vunpack.c.l.b16 %v305
        %v525 = vunpack.c.h.b16 %v305
        %v526 = vunpack.c.l.b16 %v306
        %v527 = vunpack.c.h.b16 %v306
        %v528 = vunpack.c.l.b16 %v307
        %v529 = vunpack.c.h.b16 %v307
        %v530 = vunpack.c.l.b16 %v308
        %v531 = vunpack.c.h.b16 %v308
        %v532 = vunpack.c.l.b16 %v309
        %v533 = vunpack.c.h.b16 %v309
        %v534 = vunpack.c.l.b16 %v310
        %v535 = vunpack.c.h.b16 %v310
        %v536 = vunpack.c.l.b16 %v311
        %v537 = vunpack.c.h.b16 %v311
        %v538 = vunpack.c.l.b16 %v312
        %v539 = vunpack.c.h.b16 %v312
        %v540 = vunpack.c.l.b16 %v313
        %v541 = vunpack.c.h.b16 %v313
        %v542 = vunpack.c.l.b16 %v314
        %v543 = vunpack.c.h.b16 %v314
        %v544 = vunpack.c.l.b16 %v315
        %v545 = vunpack.c.h.b16 %v315
        %v546 = vunpack.c.l.b16 %v316
        %v547 = vunpack.c.h.b16 %v316
        %v548 = vunpack.c.l.b16 %v317
        %v549 = vunpack.c.h.b16 %v317
        %v550 = vunpack.c.l.b16 %v318
        %v551 = vunpack.c.h.b16 %v318
        %v552 = vunpack.c.l.b16 %v319
        %v553 = vunpack.c.h.b16 %v319
        %v554 = vunpack.c.l.b16 %v320
        %v555 = vunpack.c.h.b16 %v320
        %v556 = vunpack.c.l.b16 %v321
        %v557 = vunpack.c.h.b16 %v321
        %v558 = vunpack.c.l.b16 %v322
        %v559 = vunpack.c.h.b16 %v322
        %v560 = vunpack.c.l.b16 %v323
        %v561 = vunpack.c.h.b16 %v323
        %v562 = vunpack.c.l.b16 %v324
        %v563 = vunpack.c.h.b16 %v324
        %v564 = vunpack.c.l.b16 %v325
        %v565 = vunpack.c.h.b16 %v325
        %v566 = vunpack.c.l.b16 %v326
        %v567 = vunpack.c.h.b16 %v326
        %v568 = vunpack.c.l.b16 %v327
        %v569 = vunpack.c.h.b16 %v327
        %v570 = vunpack.c.l.b16 %v328
        %v571 = vunpack.c.h.b16 %v328
        %v572 = vunpack.c.l.b16 %v329
        %v573 = vunpack.c.h.b16 %v329
        %v574 = vunpack.c.l.b16 %v330
        %v575 = vunpack.c.h.b16 %v330
        %v576 = vunpack.c.l.b16 %v331
        %v577 = vunpack.c.h.b16 %v331
        %v578 = vunpack.c.l.b16 %v332
        %v579 = vunpack.c.h.b16 %v332
        %v580 = vunpack.c.l.b16 %v333
        %v581 = vunpack.c.h.b16 %v333
        %v582 = vunpack.c.l.b16 %v334
        %v583 = vunpack.c.h.b16 %v334
        %v584 = vunpack.c.l.b16 %v335
        %v585 = vunpack.c.h.b16 %v335
        %v586 = vunpack.c.l.b16 %v336
        %v587 = vunpack.c.h.b16 %v336
        %v588 = vunpack.c.l.b16 %v337
        %v589 = vunpack.c.h.b16 %v337
        %v590 = vunpack.c.l.b16 %v338
        %v591 = vunpack.c.h.b16 %v338
        %v592 = vunpack.c.l.b16 %v339
        %v593 = vunpack.c.h.b16 %v339
        %v594 = vunpack.c.l.b16 %v340
        %v595 = vunpack.c.h.b16 %v340
        %v596 = vunpack.c.l.b16 %v341
        %v597 = vunpack.c.h.b16 %v341
        %v598 = vpack.c.b16 %v474, %v470
        %v599 = vpack.c.b16 %v475, %v471
        %v600 = vpack.c.b16 %v476, %v472
        %v601 = vpack.c.b16 %v477, %v473
        %v602 = vpack.c.b16 %v482, %v478
        %v603 = vpack.c.b16 %v483, %v479
        %v604 = vpack.c.b16 %v484, %v480
        %v605 = vpack.c.b16 %v485, %v481
        %v606 = vpack.c.b16 %v490, %v486
        %v607 = vpack.c.b16 %v491, %v487
        %v608 = vpack.c.b16 %v492, %v488
        %v609 = vpack.c.b16 %v493, %v489
        %v610 = vpack.c.b16 %v498, %v494
        %v611 = vpack.c.b16 %v499, %v495
        %v612 = vpack.c.b16 %v500, %v496
        %v613 = vpack.c.b16 %v501, %v497
        %v614 = vpack.c.b16 %v506, %v502
        %v615 = vpack.c.b16 %v507, %v503
        %v616 = vpack.c.b16 %v508, %v504
        %v617 = vpack.c.b16 %v509, %v505
        %v618 = vpack.c.b16 %v514, %v510
        %v619 = vpack.c.b16 %v515, %v511
        %v620 = vpack.c.b16 %v516, %v512
        %v621 = vpack.c.b16 %v517, %v513
        %v622 = vpack.c.b16 %v522, %v518
        %v623 = vpack.c.b16 %v523, %v519
        %v624 = vpack.c.b16 %v524, %v520
        %v625 = vpack.c.b16 %v525, %v521
        %v626 = vpack.c.b16 %v530, %v526
        %v627 = vpack.c.b16 %v531, %v527
        %v628 = vpack.c.b16 %v532, %v528
        %v629 = vpack.c.b16 %v533, %v529
        %v630 = vpack.c.b16 %v538, %v534
        %v631 = vpack.c.b16 %v539, %v535
        %v632 = vpack.c.b16 %v540, %v536
        %v633 = vpack.c.b16 %v541, %v537
        %v634 = vpack.c.b16 %v546, %v542
        %v635 = vpack.c.b16 %v547, %v543
        %v636 = vpack.c.b16 %v548, %v544
        %v637 = vpack.c.b16 %v549, %v545
        %v638 = vpack.c.b16 %v554, %v550
        %v639 = vpack.c.b16 %v555, %v551
        %v640 = vpack.c.b16 %v556, %v552
        %v641 = vpack.c.b16 %v557, %v553
        %v642 = vpack.c.b16 %v562, %v558
        %v643 = vpack.c.b16 %v563, %v559
        %v644 = vpack.c.b16 %v564, %v560
        %v645 = vpack.c.b16 %v565, %v561
        %v646 = vpack.c.b16 %v570, %v566
        %v647 = vpack.c.b16 %v571, %v567
        %v648 = vpack.c.b16 %v572, %v568
        %v649 = vpack.c.b16 %v573, %v569
        %v650 = vpack.c.b16 %v578, %v574
        %v651 = vpack.c.b16 %v579, %v575
        %v652 = vpack.c.b16 %v580, %v576
        %v653 = vpack.c.b16 %v581, %v577
        %v654 = vpack.c.b16 %v586, %v582
        %v655 = vpack.c.b16 %v587, %v583
        %v656 = vpack.c.b16 %v588, %v584
        %v657 = vpack.c.b16 %v589, %v585
        %v658 = vpack.c.b16 %v594, %v590
        %v659 = vpack.c.b16 %v595, %v591
        %v660 = vpack.c.b16 %v596, %v592
        %v661 = vpack.c.b16 %v597, %v593
        %v790 = vunpack.c.l.b16 %v342
        %v791 = vunpack.c.l.b16 %v343
        %v792 = vunpack.c.l.b16 %v344
        %v793 = vunpack.c.l.b16 %v345
        %v794 = vunpack.c.l.b16 %v346
        %v795 = vunpack.c.l.b16 %v347
        %v796 = vunpack.c.l.b16 %v348
        %v797 = vunpack.c.l.b16 %v349
        %v798 = vunpack.c.l.b16 %v350
        %v799 = vunpack.c.l.b16 %v351
        %v800 = vunpack.c.l.b16 %v352
        %v801 = vunpack.c.l.b16 %v353
        %v802 = vunpack.c.l.b16 %v354
        %v803 = vunpack.c.l.b16 %v355
        %v804 = vunpack.c.l.b16 %v356
        %v805 = vunpack.c.l.b16 %v357
        %v806 = vunpack.c.l.b16 %v358
        %v807 = vunpack.c.l.b16 %v359
        %v808 = vunpack.c.l.b16 %v360
        %v809 = vunpack.c.l.b16 %v361
        %v810 = vunpack.c.l.b16 %v362
        %v811 = vunpack.c.l.b16 %v363
        %v812 = vunpack.c.l.b16 %v364
        %v813 = vunpack.c.l.b16 %v365
        %v814 = vunpack.c.l.b16 %v366
        %v815 = vunpack.c.l.b16 %v367
        %v816 = vunpack.c.l.b16 %v368
        %v817 = vunpack.c.l.b16 %v369
        %v818 = vunpack.c.l.b16 %v370
        %v819 = vunpack.c.l.b16 %v371
        %v820 = vunpack.c.l.b16 %v372
        %v821 = vunpack.c.l.b16 %v373
        %v822 = vunpack.c.l.b16 %v374
        %v823 = vunpack.c.l.b16 %v375
        %v824 = vunpack.c.l.b16 %v376
        %v825 = vunpack.c.l.b16 %v377
        %v826 = vunpack.c.l.b16 %v378
        %v827 = vunpack.c.l.b16 %v379
        %v828 = vunpack.c.l.b16 %v380
        %v829 = vunpack.c.l.b16 %v381
        %v830 = vunpack.c.l.b16 %v382
        %v831 = vunpack.c.l.b16 %v383
        %v832 = vunpack.c.l.b16 %v384
        %v833 = vunpack.c.l.b16 %v385
        %v834 = vunpack.c.l.b16 %v386
        %v835 = vunpack.c.l.b16 %v387
        %v836 = vunpack.c.l.b16 %v388
        %v837 = vunpack.c.l.b16 %v389
        %v838 = vunpack.c.l.b16 %v390
        %v839 = vunpack.c.l.b16 %v391
        %v840 = vunpack.c.l.b16 %v392
        %v841 = vunpack.c.l.b16 %v393
        %v842 = vunpack.c.l.b16 %v394
        %v843 = vunpack.c.l.b16 %v395
        %v844 = vunpack.c.l.b16 %v396
        %v845 = vunpack.c.l.b16 %v397
        %v846 = vunpack.c.l.b16 %v398
        %v847 = vunpack.c.l.b16 %v399
        %v848 = vunpack.c.l.b16 %v400
        %v849 = vunpack.c.l.b16 %v401
        %v850 = vunpack.c.l.b16 %v402
        %v851 = vunpack.c.l.b16 %v403
        %v852 = vunpack.c.l.b16 %v404
        %v853 = vunpack.c.l.b16 %v405
        %v854 = vpack.c.b16 %v791, %v790
        %v855 = vpack.c.b16 %v793, %v792
        %v856 = vpack.c.b16 %v795, %v794
        %v857 = vpack.c.b16 %v797, %v796
        %v858 = vpack.c.b16 %v799, %v798
        %v859 = vpack.c.b16 %v801, %v800
        %v860 = vpack.c.b16 %v803, %v802
        %v861 = vpack.c.b16 %v805, %v804
        %v862 = vpack.c.b16 %v807, %v806
        %v863 = vpack.c.b16 %v809, %v808
        %v864 = vpack.c.b16 %v811, %v810
        %v865 = vpack.c.b16 %v813, %v812
        %v866 = vpack.c.b16 %v815, %v814
        %v867 = vpack.c.b16 %v817, %v816
        %v868 = vpack.c.b16 %v819, %v818
        %v869 = vpack.c.b16 %v821, %v820
        %v870 = vpack.c.b16 %v823, %v822
        %v871 = vpack.c.b16 %v825, %v824
        %v872 = vpack.c.b16 %v827, %v826
        %v873 = vpack.c.b16 %v829, %v828
        %v874 = vpack.c.b16 %v831, %v830
        %v875 = vpack.c.b16 %v833, %v832
        %v876 = vpack.c.b16 %v835, %v834
        %v877 = vpack.c.b16 %v837, %v836
        %v878 = vpack.c.b16 %v839, %v838
        %v879 = vpack.c.b16 %v841, %v840
        %v880 = vpack.c.b16 %v843, %v842
        %v881 = vpack.c.b16 %v845, %v844
        %v882 = vpack.c.b16 %v847, %v846
        %v883 = vpack.c.b16 %v849, %v848
        %v884 = vpack.c.b16 %v851, %v850
        %v885 = vpack.c.b16 %v853, %v852
        %918 = vmatpush.bf16.msra.mxu0 %v861
        %919 = vmatpush.bf16.msra.mxu0 %v860
        %920 = vmatpush.bf16.msra.mxu0 %v859
        %921 = vmatpush.bf16.msra.mxu0 %v858
        %922 = vmatpush.bf16.msra.mxu0 %v857
        %923 = vmatpush.bf16.msra.mxu0 %v856
        %924 = vmatpush.bf16.msra.mxu0 %v855
        %925 = vmatpush.bf16.msra.mxu0 %v854
        %926 = vmatmul.bf16.gmra.mxu0 %v598
        %v927 = vpop.f32.mrf.mxu0
        %v928 = vadd.f32 0.0, %v927
        %v929 = vpop.f32.mrf.mxu0
        %v930 = vadd.f32 0.0, %v929
        %931 = vmatmul.bf16.gmra.mxu0 %v602
        %v932 = vpop.f32.mrf.mxu0
        %v933 = vadd.f32 0.0, %v932
        %v934 = vpop.f32.mrf.mxu0
        %v935 = vadd.f32 0.0, %v934
        %936 = vmatmul.bf16.gmra.mxu0 %v606
        %v937 = vpop.f32.mrf.mxu0
        %v938 = vadd.f32 0.0, %v937
        %v939 = vpop.f32.mrf.mxu0
        %v940 = vadd.f32 0.0, %v939
        %941 = vmatmul.bf16.gmra.mxu0 %v610
        %v942 = vpop.f32.mrf.mxu0
        %v943 = vadd.f32 0.0, %v942
        %v944 = vpop.f32.mrf.mxu0
        %v945 = vadd.f32 0.0, %v944
        %946 = vmatmul.bf16.gmra.mxu0 %v614
        %v947 = vpop.f32.mrf.mxu0
        %v948 = vadd.f32 0.0, %v947
        %v949 = vpop.f32.mrf.mxu0
        %v950 = vadd.f32 0.0, %v949
        %951 = vmatmul.bf16.gmra.mxu0 %v618
        %v952 = vpop.f32.mrf.mxu0
        %v953 = vadd.f32 0.0, %v952
        %v954 = vpop.f32.mrf.mxu0
        %v955 = vadd.f32 0.0, %v954
        %956 = vmatmul.bf16.gmra.mxu0 %v622
        %v957 = vpop.f32.mrf.mxu0
        %v958 = vadd.f32 0.0, %v957
        %v959 = vpop.f32.mrf.mxu0
        %v960 = vadd.f32 0.0, %v959
        %961 = vmatmul.bf16.gmra.mxu0 %v626
        %v962 = vpop.f32.mrf.mxu0
        %v963 = vadd.f32 0.0, %v962
        %v964 = vpop.f32.mrf.mxu0
        %v965 = vadd.f32 0.0, %v964
        %966 = vmatmul.bf16.gmra.mxu0 %v630
        %v967 = vpop.f32.mrf.mxu0
        %v968 = vadd.f32 0.0, %v967
        %v969 = vpop.f32.mrf.mxu0
        %v970 = vadd.f32 0.0, %v969
        %971 = vmatmul.bf16.gmra.mxu0 %v634
        %v972 = vpop.f32.mrf.mxu0
        %v973 = vadd.f32 0.0, %v972
        %v974 = vpop.f32.mrf.mxu0
        %v975 = vadd.f32 0.0, %v974
        %976 = vmatmul.bf16.gmra.mxu0 %v638
        %v977 = vpop.f32.mrf.mxu0
        %v978 = vadd.f32 0.0, %v977
        %v979 = vpop.f32.mrf.mxu0
        %v980 = vadd.f32 0.0, %v979
        %981 = vmatmul.bf16.gmra.mxu0 %v642
        %v982 = vpop.f32.mrf.mxu0
        %v983 = vadd.f32 0.0, %v982
        %v984 = vpop.f32.mrf.mxu0
        %v985 = vadd.f32 0.0, %v984
        %986 = vmatmul.bf16.gmra.mxu0 %v646
        %v987 = vpop.f32.mrf.mxu0
        %v988 = vadd.f32 0.0, %v987
        %v989 = vpop.f32.mrf.mxu0
        %v990 = vadd.f32 0.0, %v989
        %991 = vmatmul.bf16.gmra.mxu0 %v650
        %v992 = vpop.f32.mrf.mxu0
        %v993 = vadd.f32 0.0, %v992
        %v994 = vpop.f32.mrf.mxu0
        %v995 = vadd.f32 0.0, %v994
        %996 = vmatmul.bf16.gmra.mxu0 %v654
        %v997 = vpop.f32.mrf.mxu0
        %v998 = vadd.f32 0.0, %v997
        %v999 = vpop.f32.mrf.mxu0
        %v1000 = vadd.f32 0.0, %v999
        %1001 = vmatmul.bf16.gmra.mxu0 %v658
        %v1002 = vpop.f32.mrf.mxu0
        %v1003 = vadd.f32 0.0, %v1002
        %v1004 = vpop.f32.mrf.mxu0
        %v1005 = vadd.f32 0.0, %v1004
        %1006 = vdwg.mxu0
        %1007 = vmatpush.bf16.msra.mxu0 %v869
        %1008 = vmatpush.bf16.msra.mxu0 %v868
        %1009 = vmatpush.bf16.msra.mxu0 %v867
        %1010 = vmatpush.bf16.msra.mxu0 %v866
        %1011 = vmatpush.bf16.msra.mxu0 %v865
        %1012 = vmatpush.bf16.msra.mxu0 %v864
        %1013 = vmatpush.bf16.msra.mxu0 %v863
        %1014 = vmatpush.bf16.msra.mxu0 %v862
        %1015 = vmatmul.bf16.gmra.mxu0 %v599
        %v1016 = vpop.f32.mrf.mxu0
        %v1017 = vadd.f32 %v928, %v1016
        %v1018 = vpop.f32.mrf.mxu0
        %v1019 = vadd.f32 %v930, %v1018
        %1020 = vmatmul.bf16.gmra.mxu0 %v603
        %v1021 = vpop.f32.mrf.mxu0
        %v1022 = vadd.f32 %v933, %v1021
        %v1023 = vpop.f32.mrf.mxu0
        %v1024 = vadd.f32 %v935, %v1023
        %1025 = vmatmul.bf16.gmra.mxu0 %v607
        %v1026 = vpop.f32.mrf.mxu0
        %v1027 = vadd.f32 %v938, %v1026
        %v1028 = vpop.f32.mrf.mxu0
        %v1029 = vadd.f32 %v940, %v1028
        %1030 = vmatmul.bf16.gmra.mxu0 %v611
        %v1031 = vpop.f32.mrf.mxu0
        %v1032 = vadd.f32 %v943, %v1031
        %v1033 = vpop.f32.mrf.mxu0
        %v1034 = vadd.f32 %v945, %v1033
        %1035 = vmatmul.bf16.gmra.mxu0 %v615
        %v1036 = vpop.f32.mrf.mxu0
        %v1037 = vadd.f32 %v948, %v1036
        %v1038 = vpop.f32.mrf.mxu0
        %v1039 = vadd.f32 %v950, %v1038
        %1040 = vmatmul.bf16.gmra.mxu0 %v619
        %v1041 = vpop.f32.mrf.mxu0
        %v1042 = vadd.f32 %v953, %v1041
        %v1043 = vpop.f32.mrf.mxu0
        %v1044 = vadd.f32 %v955, %v1043
        %1045 = vmatmul.bf16.gmra.mxu0 %v623
        %v1046 = vpop.f32.mrf.mxu0
        %v1047 = vadd.f32 %v958, %v1046
        %v1048 = vpop.f32.mrf.mxu0
        %v1049 = vadd.f32 %v960, %v1048
        %1050 = vmatmul.bf16.gmra.mxu0 %v627
        %v1051 = vpop.f32.mrf.mxu0
        %v1052 = vadd.f32 %v963, %v1051
        %v1053 = vpop.f32.mrf.mxu0
        %v1054 = vadd.f32 %v965, %v1053
        %1055 = vmatmul.bf16.gmra.mxu0 %v631
        %v1056 = vpop.f32.mrf.mxu0
        %v1057 = vadd.f32 %v968, %v1056
        %v1058 = vpop.f32.mrf.mxu0
        %v1059 = vadd.f32 %v970, %v1058
        %1060 = vmatmul.bf16.gmra.mxu0 %v635
        %v1061 = vpop.f32.mrf.mxu0
        %v1062 = vadd.f32 %v973, %v1061
        %v1063 = vpop.f32.mrf.mxu0
        %v1064 = vadd.f32 %v975, %v1063
        %1065 = vmatmul.bf16.gmra.mxu0 %v639
        %v1066 = vpop.f32.mrf.mxu0
        %v1067 = vadd.f32 %v978, %v1066
        %v1068 = vpop.f32.mrf.mxu0
        %v1069 = vadd.f32 %v980, %v1068
        %1070 = vmatmul.bf16.gmra.mxu0 %v643
        %v1071 = vpop.f32.mrf.mxu0
        %v1072 = vadd.f32 %v983, %v1071
        %v1073 = vpop.f32.mrf.mxu0
        %v1074 = vadd.f32 %v985, %v1073
        %1075 = vmatmul.bf16.gmra.mxu0 %v647
        %v1076 = vpop.f32.mrf.mxu0
        %v1077 = vadd.f32 %v988, %v1076
        %v1078 = vpop.f32.mrf.mxu0
        %v1079 = vadd.f32 %v990, %v1078
        %1080 = vmatmul.bf16.gmra.mxu0 %v651
        %v1081 = vpop.f32.mrf.mxu0
        %v1082 = vadd.f32 %v993, %v1081
        %v1083 = vpop.f32.mrf.mxu0
        %v1084 = vadd.f32 %v995, %v1083
        %1085 = vmatmul.bf16.gmra.mxu0 %v655
        %v1086 = vpop.f32.mrf.mxu0
        %v1087 = vadd.f32 %v998, %v1086
        %v1088 = vpop.f32.mrf.mxu0
        %v1089 = vadd.f32 %v1000, %v1088
        %1090 = vmatmul.bf16.gmra.mxu0 %v659
        %v1091 = vpop.f32.mrf.mxu0
        %v1092 = vadd.f32 %v1003, %v1091
        %v1093 = vpop.f32.mrf.mxu0
        %v1094 = vadd.f32 %v1005, %v1093
        %1095 = vdwg.mxu0
        %1096 = vmatpush.bf16.msra.mxu0 %v877
        %1097 = vmatpush.bf16.msra.mxu0 %v876
        %1098 = vmatpush.bf16.msra.mxu0 %v875
        %1099 = vmatpush.bf16.msra.mxu0 %v874
        %1100 = vmatpush.bf16.msra.mxu0 %v873
        %1101 = vmatpush.bf16.msra.mxu0 %v872
        %1102 = vmatpush.bf16.msra.mxu0 %v871
        %1103 = vmatpush.bf16.msra.mxu0 %v870
        %1104 = vmatmul.bf16.gmra.mxu0 %v600
        %v1105 = vpop.f32.mrf.mxu0
        %v1106 = vadd.f32 %v1017, %v1105
        %v1107 = vpop.f32.mrf.mxu0
        %v1108 = vadd.f32 %v1019, %v1107
        %1109 = vmatmul.bf16.gmra.mxu0 %v604
        %v1110 = vpop.f32.mrf.mxu0
        %v1111 = vadd.f32 %v1022, %v1110
        %v1112 = vpop.f32.mrf.mxu0
        %v1113 = vadd.f32 %v1024, %v1112
        %1114 = vmatmul.bf16.gmra.mxu0 %v608
        %v1115 = vpop.f32.mrf.mxu0
        %v1116 = vadd.f32 %v1027, %v1115
        %v1117 = vpop.f32.mrf.mxu0
        %v1118 = vadd.f32 %v1029, %v1117
        %1119 = vmatmul.bf16.gmra.mxu0 %v612
        %v1120 = vpop.f32.mrf.mxu0
        %v1121 = vadd.f32 %v1032, %v1120
        %v1122 = vpop.f32.mrf.mxu0
        %v1123 = vadd.f32 %v1034, %v1122
        %1124 = vmatmul.bf16.gmra.mxu0 %v616
        %v1125 = vpop.f32.mrf.mxu0
        %v1126 = vadd.f32 %v1037, %v1125
        %v1127 = vpop.f32.mrf.mxu0
        %v1128 = vadd.f32 %v1039, %v1127
        %1129 = vmatmul.bf16.gmra.mxu0 %v620
        %v1130 = vpop.f32.mrf.mxu0
        %v1131 = vadd.f32 %v1042, %v1130
        %v1132 = vpop.f32.mrf.mxu0
        %v1133 = vadd.f32 %v1044, %v1132
        %1134 = vmatmul.bf16.gmra.mxu0 %v624
        %v1135 = vpop.f32.mrf.mxu0
        %v1136 = vadd.f32 %v1047, %v1135
        %v1137 = vpop.f32.mrf.mxu0
        %v1138 = vadd.f32 %v1049, %v1137
        %1139 = vmatmul.bf16.gmra.mxu0 %v628
        %v1140 = vpop.f32.mrf.mxu0
        %v1141 = vadd.f32 %v1052, %v1140
        %v1142 = vpop.f32.mrf.mxu0
        %v1143 = vadd.f32 %v1054, %v1142
        %1144 = vmatmul.bf16.gmra.mxu0 %v632
        %v1145 = vpop.f32.mrf.mxu0
        %v1146 = vadd.f32 %v1057, %v1145
        %v1147 = vpop.f32.mrf.mxu0
        %v1148 = vadd.f32 %v1059, %v1147
        %1149 = vmatmul.bf16.gmra.mxu0 %v636
        %v1150 = vpop.f32.mrf.mxu0
        %v1151 = vadd.f32 %v1062, %v1150
        %v1152 = vpop.f32.mrf.mxu0
        %v1153 = vadd.f32 %v1064, %v1152
        %1154 = vmatmul.bf16.gmra.mxu0 %v640
        %v1155 = vpop.f32.mrf.mxu0
        %v1156 = vadd.f32 %v1067, %v1155
        %v1157 = vpop.f32.mrf.mxu0
        %v1158 = vadd.f32 %v1069, %v1157
        %1159 = vmatmul.bf16.gmra.mxu0 %v644
        %v1160 = vpop.f32.mrf.mxu0
        %v1161 = vadd.f32 %v1072, %v1160
        %v1162 = vpop.f32.mrf.mxu0
        %v1163 = vadd.f32 %v1074, %v1162
        %1164 = vmatmul.bf16.gmra.mxu0 %v648
        %v1165 = vpop.f32.mrf.mxu0
        %v1166 = vadd.f32 %v1077, %v1165
        %v1167 = vpop.f32.mrf.mxu0
        %v1168 = vadd.f32 %v1079, %v1167
        %1169 = vmatmul.bf16.gmra.mxu0 %v652
        %v1170 = vpop.f32.mrf.mxu0
        %v1171 = vadd.f32 %v1082, %v1170
        %v1172 = vpop.f32.mrf.mxu0
        %v1173 = vadd.f32 %v1084, %v1172
        %1174 = vmatmul.bf16.gmra.mxu0 %v656
        %v1175 = vpop.f32.mrf.mxu0
        %v1176 = vadd.f32 %v1087, %v1175
        %v1177 = vpop.f32.mrf.mxu0
        %v1178 = vadd.f32 %v1089, %v1177
        %1179 = vmatmul.bf16.gmra.mxu0 %v660
        %v1180 = vpop.f32.mrf.mxu0
        %v1181 = vadd.f32 %v1092, %v1180
        %v1182 = vpop.f32.mrf.mxu0
        %v1183 = vadd.f32 %v1094, %v1182
        %1184 = vdwg.mxu0
        %1185 = vmatpush.bf16.msra.mxu0 %v885
        %1186 = vmatpush.bf16.msra.mxu0 %v884
        %1187 = vmatpush.bf16.msra.mxu0 %v883
        %1188 = vmatpush.bf16.msra.mxu0 %v882
        %1189 = vmatpush.bf16.msra.mxu0 %v881
        %1190 = vmatpush.bf16.msra.mxu0 %v880
        %1191 = vmatpush.bf16.msra.mxu0 %v879
        %1192 = vmatpush.bf16.msra.mxu0 %v878
        %1193 = vmatmul.bf16.gmra.mxu0 %v601
        %v1194 = vpop.f32.mrf.mxu0
        %v1195 = vadd.f32 %v1106, %v1194
        %v1196 = vpop.f32.mrf.mxu0
        %v1197 = vadd.f32 %v1108, %v1196
        %1198 = vmatmul.bf16.gmra.mxu0 %v605
        %v1199 = vpop.f32.mrf.mxu0
        %v1200 = vadd.f32 %v1111, %v1199
        %v1201 = vpop.f32.mrf.mxu0
        %v1202 = vadd.f32 %v1113, %v1201
        %1203 = vmatmul.bf16.gmra.mxu0 %v609
        %v1204 = vpop.f32.mrf.mxu0
        %v1205 = vadd.f32 %v1116, %v1204
        %v1206 = vpop.f32.mrf.mxu0
        %v1207 = vadd.f32 %v1118, %v1206
        %1208 = vmatmul.bf16.gmra.mxu0 %v613
        %v1209 = vpop.f32.mrf.mxu0
        %v1210 = vadd.f32 %v1121, %v1209
        %v1211 = vpop.f32.mrf.mxu0
        %v1212 = vadd.f32 %v1123, %v1211
        %1213 = vmatmul.bf16.gmra.mxu0 %v617
        %v1214 = vpop.f32.mrf.mxu0
        %v1215 = vadd.f32 %v1126, %v1214
        %v1216 = vpop.f32.mrf.mxu0
        %v1217 = vadd.f32 %v1128, %v1216
        %1218 = vmatmul.bf16.gmra.mxu0 %v621
        %v1219 = vpop.f32.mrf.mxu0
        %v1220 = vadd.f32 %v1131, %v1219
        %v1221 = vpop.f32.mrf.mxu0
        %v1222 = vadd.f32 %v1133, %v1221
        %1223 = vmatmul.bf16.gmra.mxu0 %v625
        %v1224 = vpop.f32.mrf.mxu0
        %v1225 = vadd.f32 %v1136, %v1224
        %v1226 = vpop.f32.mrf.mxu0
        %v1227 = vadd.f32 %v1138, %v1226
        %1228 = vmatmul.bf16.gmra.mxu0 %v629
        %v1229 = vpop.f32.mrf.mxu0
        %v1230 = vadd.f32 %v1141, %v1229
        %v1231 = vpop.f32.mrf.mxu0
        %v1232 = vadd.f32 %v1143, %v1231
        %1233 = vmatmul.bf16.gmra.mxu0 %v633
        %v1234 = vpop.f32.mrf.mxu0
        %v1235 = vadd.f32 %v1146, %v1234
        %v1236 = vpop.f32.mrf.mxu0
        %v1237 = vadd.f32 %v1148, %v1236
        %1238 = vmatmul.bf16.gmra.mxu0 %v637
        %v1239 = vpop.f32.mrf.mxu0
        %v1240 = vadd.f32 %v1151, %v1239
        %v1241 = vpop.f32.mrf.mxu0
        %v1242 = vadd.f32 %v1153, %v1241
        %1243 = vmatmul.bf16.gmra.mxu0 %v641
        %v1244 = vpop.f32.mrf.mxu0
        %v1245 = vadd.f32 %v1156, %v1244
        %v1246 = vpop.f32.mrf.mxu0
        %v1247 = vadd.f32 %v1158, %v1246
        %1248 = vmatmul.bf16.gmra.mxu0 %v645
        %v1249 = vpop.f32.mrf.mxu0
        %v1250 = vadd.f32 %v1161, %v1249
        %v1251 = vpop.f32.mrf.mxu0
        %v1252 = vadd.f32 %v1163, %v1251
        %1253 = vmatmul.bf16.gmra.mxu0 %v649
        %v1254 = vpop.f32.mrf.mxu0
        %v1255 = vadd.f32 %v1166, %v1254
        %v1256 = vpop.f32.mrf.mxu0
        %v1257 = vadd.f32 %v1168, %v1256
        %1258 = vmatmul.bf16.gmra.mxu0 %v653
        %v1259 = vpop.f32.mrf.mxu0
        %v1260 = vadd.f32 %v1171, %v1259
        %v1261 = vpop.f32.mrf.mxu0
        %v1262 = vadd.f32 %v1173, %v1261
        %1263 = vmatmul.bf16.gmra.mxu0 %v657
        %v1264 = vpop.f32.mrf.mxu0
        %v1265 = vadd.f32 %v1176, %v1264
        %v1266 = vpop.f32.mrf.mxu0
        %v1267 = vadd.f32 %v1178, %v1266
        %1268 = vmatmul.bf16.gmra.mxu0 %v661
        %v1269 = vpop.f32.mrf.mxu0
        %v1270 = vadd.f32 %v1181, %v1269
        %v1271 = vpop.f32.mrf.mxu0
        %v1272 = vadd.f32 %v1183, %v1271
        %1273 = vdwg.mxu0
        %v1274 = vadd.f32 %v246, %v1195
        %v1275 = vadd.f32 %v247, %v1197
        %v1276 = vadd.f32 %v248, %v1200
        %v1277 = vadd.f32 %v249, %v1202
        %v1278 = vadd.f32 %v250, %v1205
        %v1279 = vadd.f32 %v251, %v1207
        %v1280 = vadd.f32 %v252, %v1210
        %v1281 = vadd.f32 %v253, %v1212
        %v1282 = vadd.f32 %v254, %v1215
        %v1283 = vadd.f32 %v255, %v1217
        %v1284 = vadd.f32 %v256, %v1220
        %v1285 = vadd.f32 %v257, %v1222
        %v1286 = vadd.f32 %v258, %v1225
        %v1287 = vadd.f32 %v259, %v1227
        %v1288 = vadd.f32 %v260, %v1230
        %v1289 = vadd.f32 %v261, %v1232
        %v1290 = vadd.f32 %v262, %v1235
        %v1291 = vadd.f32 %v263, %v1237
        %v1292 = vadd.f32 %v264, %v1240
        %v1293 = vadd.f32 %v265, %v1242
        %v1294 = vadd.f32 %v266, %v1245
        %v1295 = vadd.f32 %v267, %v1247
        %v1296 = vadd.f32 %v268, %v1250
        %v1297 = vadd.f32 %v269, %v1252
        %v1298 = vadd.f32 %v270, %v1255
        %v1299 = vadd.f32 %v271, %v1257
        %v1300 = vadd.f32 %v272, %v1260
        %v1301 = vadd.f32 %v273, %v1262
        %v1302 = vadd.f32 %v274, %v1265
        %v1303 = vadd.f32 %v275, %v1267
        %v1304 = vadd.f32 %v276, %v1270
        %v1305 = vadd.f32 %v277, %v1272
        %1306 = vst [vmem:[#allocation2] sm:$0xff] %v1274
        %1307 = vst [vmem:[#allocation2 + $0x8] sm:$0xff] %v1275
        %1308 = vst [vmem:[#allocation2 + $0x10] sm:$0xff] %v1276
        %1309 = vst [vmem:[#allocation2 + $0x18] sm:$0xff] %v1277
        %1310 = vst [vmem:[#allocation2 + $0x20] sm:$0xff] %v1278
        %1311 = vst [vmem:[#allocation2 + $0x28] sm:$0xff] %v1279
        %1312 = vst [vmem:[#allocation2 + $0x30] sm:$0xff] %v1280
        %1313 = vst [vmem:[#allocation2 + $0x38] sm:$0xff] %v1281
        %1314 = vst [vmem:[#allocation2 + $0x40] sm:$0xff] %v1282
        %1315 = vst [vmem:[#allocation2 + $0x48] sm:$0xff] %v1283
        %1316 = vst [vmem:[#allocation2 + $0x50] sm:$0xff] %v1284
        %1317 = vst [vmem:[#allocation2 + $0x58] sm:$0xff] %v1285
        %1318 = vst [vmem:[#allocation2 + $0x60] sm:$0xff] %v1286
        %1319 = vst [vmem:[#allocation2 + $0x68] sm:$0xff] %v1287
        %1320 = vst [vmem:[#allocation2 + $0x70] sm:$0xff] %v1288
        %1321 = vst [vmem:[#allocation2 + $0x78] sm:$0xff] %v1289
        %1322 = vst [vmem:[#allocation2 + $0x80] sm:$0xff] %v1290
        %1323 = vst [vmem:[#allocation2 + $0x88] sm:$0xff] %v1291
        %1324 = vst [vmem:[#allocation2 + $0x90] sm:$0xff] %v1292
        %1325 = vst [vmem:[#allocation2 + $0x98] sm:$0xff] %v1293
        %1326 = vst [vmem:[#allocation2 + $0xa0] sm:$0xff] %v1294
        %1327 = vst [vmem:[#allocation2 + $0xa8] sm:$0xff] %v1295
        %1328 = vst [vmem:[#allocation2 + $0xb0] sm:$0xff] %v1296
        %1329 = vst [vmem:[#allocation2 + $0xb8] sm:$0xff] %v1297
        %1330 = vst [vmem:[#allocation2 + $0xc0] sm:$0xff] %v1298
        %1331 = vst [vmem:[#allocation2 + $0xc8] sm:$0xff] %v1299
        %1332 = vst [vmem:[#allocation2 + $0xd0] sm:$0xff] %v1300
        %1333 = vst [vmem:[#allocation2 + $0xd8] sm:$0xff] %v1301
        %1334 = vst [vmem:[#allocation2 + $0xe0] sm:$0xff] %v1302
        %1335 = vst [vmem:[#allocation2 + $0xe8] sm:$0xff] %v1303
        %1336 = vst [vmem:[#allocation2 + $0xf0] sm:$0xff] %v1304
        %1337 = vst [vmem:[#allocation2 + $0xf8] sm:$0xff] %v1305
        // Predicated region
        $region41: #{tpu_custom_call.1} parent=27 // pred_check
          %p1338 = pneg %p210
        $region42: #{tpu_custom_call.1} parent=27 // pred_check_branch
          %1340 = sbr.rel (%p1338) target = $region44
        $region43: #{tpu_custom_call.1} parent=27 // pred_region
          %v1341 = vld [vmem:[#allocation2] sm:$0xff]
          %v1342 = vld [vmem:[#allocation2 + $0x8] sm:$0xff]
          %v1343 = vld [vmem:[#allocation2 + $0x10] sm:$0xff]
          %v1344 = vld [vmem:[#allocation2 + $0x18] sm:$0xff]
          %v1345 = vld [vmem:[#allocation2 + $0x20] sm:$0xff]
          %v1346 = vld [vmem:[#allocation2 + $0x28] sm:$0xff]
          %v1347 = vld [vmem:[#allocation2 + $0x30] sm:$0xff]
          %v1348 = vld [vmem:[#allocation2 + $0x38] sm:$0xff]
          %v1349 = vld [vmem:[#allocation2 + $0x40] sm:$0xff]
          %v1350 = vld [vmem:[#allocation2 + $0x48] sm:$0xff]
          %v1351 = vld [vmem:[#allocation2 + $0x50] sm:$0xff]
          %v1352 = vld [vmem:[#allocation2 + $0x58] sm:$0xff]
          %v1353 = vld [vmem:[#allocation2 + $0x60] sm:$0xff]
          %v1354 = vld [vmem:[#allocation2 + $0x68] sm:$0xff]
          %v1355 = vld [vmem:[#allocation2 + $0x70] sm:$0xff]
          %v1356 = vld [vmem:[#allocation2 + $0x78] sm:$0xff]
          %v1357 = vld [vmem:[#allocation2 + $0x80] sm:$0xff]
          %v1358 = vld [vmem:[#allocation2 + $0x88] sm:$0xff]
          %v1359 = vld [vmem:[#allocation2 + $0x90] sm:$0xff]
          %v1360 = vld [vmem:[#allocation2 + $0x98] sm:$0xff]
          %v1361 = vld [vmem:[#allocation2 + $0xa0] sm:$0xff]
          %v1362 = vld [vmem:[#allocation2 + $0xa8] sm:$0xff]
          %v1363 = vld [vmem:[#allocation2 + $0xb0] sm:$0xff]
          %v1364 = vld [vmem:[#allocation2 + $0xb8] sm:$0xff]
          %v1365 = vld [vmem:[#allocation2 + $0xc0] sm:$0xff]
          %v1366 = vld [vmem:[#allocation2 + $0xc8] sm:$0xff]
          %v1367 = vld [vmem:[#allocation2 + $0xd0] sm:$0xff]
          %v1368 = vld [vmem:[#allocation2 + $0xd8] sm:$0xff]
          %v1369 = vld [vmem:[#allocation2 + $0xe0] sm:$0xff]
          %v1370 = vld [vmem:[#allocation2 + $0xe8] sm:$0xff]
          %v1371 = vld [vmem:[#allocation2 + $0xf0] sm:$0xff]
          %v1372 = vld [vmem:[#allocation2 + $0xf8] sm:$0xff]
          %v1373 = vpack.c.bf16 %v1341, %v1341
          %v1374 = vpack.c.bf16 %v1342, %v1342
          %v1375 = vpack.c.bf16 %v1343, %v1343
          %v1376 = vpack.c.bf16 %v1344, %v1344
          %v1377 = vpack.c.bf16 %v1345, %v1345
          %v1378 = vpack.c.bf16 %v1346, %v1346
          %v1379 = vpack.c.bf16 %v1347, %v1347
          %v1380 = vpack.c.bf16 %v1348, %v1348
          %v1381 = vpack.c.bf16 %v1349, %v1349
          %v1382 = vpack.c.bf16 %v1350, %v1350
          %v1383 = vpack.c.bf16 %v1351, %v1351
          %v1384 = vpack.c.bf16 %v1352, %v1352
          %v1385 = vpack.c.bf16 %v1353, %v1353
          %v1386 = vpack.c.bf16 %v1354, %v1354
          %v1387 = vpack.c.bf16 %v1355, %v1355
          %v1388 = vpack.c.bf16 %v1356, %v1356
          %v1389 = vpack.c.bf16 %v1357, %v1357
          %v1390 = vpack.c.bf16 %v1358, %v1358
          %v1391 = vpack.c.bf16 %v1359, %v1359
          %v1392 = vpack.c.bf16 %v1360, %v1360
          %v1393 = vpack.c.bf16 %v1361, %v1361
          %v1394 = vpack.c.bf16 %v1362, %v1362
          %v1395 = vpack.c.bf16 %v1363, %v1363
          %v1396 = vpack.c.bf16 %v1364, %v1364
          %v1397 = vpack.c.bf16 %v1365, %v1365
          %v1398 = vpack.c.bf16 %v1366, %v1366
          %v1399 = vpack.c.bf16 %v1367, %v1367
          %v1400 = vpack.c.bf16 %v1368, %v1368
          %v1401 = vpack.c.bf16 %v1369, %v1369
          %v1402 = vpack.c.bf16 %v1370, %v1370
          %v1403 = vpack.c.bf16 %v1371, %v1371
          %v1404 = vpack.c.bf16 %v1372, %v1372
          %1405 = vst [vmem:[%s205] sm:$0xf] %v1373
          %1406 = vst [vmem:[%s205 + $0x4] sm:$0xf] %v1374
          %1407 = vst [vmem:[%s205 + $0x8] sm:$0xf] %v1375
          %1408 = vst [vmem:[%s205 + $0xc] sm:$0xf] %v1376
          %1409 = vst [vmem:[%s205 + $0x10] sm:$0xf] %v1377
          %1410 = vst [vmem:[%s205 + $0x14] sm:$0xf] %v1378
          %1411 = vst [vmem:[%s205 + $0x18] sm:$0xf] %v1379
          %1412 = vst [vmem:[%s205 + $0x1c] sm:$0xf] %v1380
          %1413 = vst [vmem:[%s205 + $0x20] sm:$0xf] %v1381
          %1414 = vst [vmem:[%s205 + $0x24] sm:$0xf] %v1382
          %1415 = vst [vmem:[%s205 + $0x28] sm:$0xf] %v1383
          %1416 = vst [vmem:[%s205 + $0x2c] sm:$0xf] %v1384
          %1417 = vst [vmem:[%s205 + $0x30] sm:$0xf] %v1385
          %1418 = vst [vmem:[%s205 + $0x34] sm:$0xf] %v1386
          %1419 = vst [vmem:[%s205 + $0x38] sm:$0xf] %v1387
          %1420 = vst [vmem:[%s205 + $0x3c] sm:$0xf] %v1388
          %1421 = vst [vmem:[%s205 + $0x40] sm:$0xf] %v1389
          %1422 = vst [vmem:[%s205 + $0x44] sm:$0xf] %v1390
          %1423 = vst [vmem:[%s205 + $0x48] sm:$0xf] %v1391
          %1424 = vst [vmem:[%s205 + $0x4c] sm:$0xf] %v1392
          %1425 = vst [vmem:[%s205 + $0x50] sm:$0xf] %v1393
          %1426 = vst [vmem:[%s205 + $0x54] sm:$0xf] %v1394
          %1427 = vst [vmem:[%s205 + $0x58] sm:$0xf] %v1395
          %1428 = vst [vmem:[%s205 + $0x5c] sm:$0xf] %v1396
          %1429 = vst [vmem:[%s205 + $0x60] sm:$0xf] %v1397
          %1430 = vst [vmem:[%s205 + $0x64] sm:$0xf] %v1398
          %1431 = vst [vmem:[%s205 + $0x68] sm:$0xf] %v1399
          %1432 = vst [vmem:[%s205 + $0x6c] sm:$0xf] %v1400
          %1433 = vst [vmem:[%s205 + $0x70] sm:$0xf] %v1401
          %1434 = vst [vmem:[%s205 + $0x74] sm:$0xf] %v1402
          %1435 = vst [vmem:[%s205 + $0x78] sm:$0xf] %v1403
          %1436 = vst [vmem:[%s205 + $0x7c] sm:$0xf] %v1404
        $region44: #{tpu_custom_call.1} parent=27 // pred_fallthru
          _
        %s1437 = sand.u32 %s94, 1
        %s1438 = scalar_lea.sflag [#allocation5], %s1437
        %s1439 = sand.u32 %s94, 1
        %s1440 = smul.addr %s1439, 128
        %s1441 = scalar_lea.vmem [#allocation8], %s1440
        // Predicated region
        $region45: #{tpu_custom_call.1} parent=27 // pred_check
          %p1442 = pneg %p104
        $region46: #{tpu_custom_call.1} parent=27 // pred_check_branch
          %1444 = sbr.rel (%p1442) target = $region48
        $region47: #{tpu_custom_call.1} parent=27 // pred_region
          %s1445 = smul.u32 32, %s24
          %1447 = vsyncadd %s1438, 0
          %s1448 = smul.addr %s1445, 4
          %s1449 = scalar_lea.hbm %s2, %s1448
          %s1450 = sshll.u32 %s1441, 4
          %s1451 = int_to_ptr.vmem [resolvable:$true] %s1450
          %s1452 = sshll.u32 %s1449, 4
          %s1453 = int_to_ptr.hbm [resolvable:$true] %s1452
          %1458 = dma.vmem_to_hbm [thread:$0]  %s1451, 2048, %s1453, %s1438, 64, 64, 4
        $region48: #{tpu_custom_call.1} parent=27 // pred_fallthru
          _
      $region28: #{tpu_custom_call.1} parent=5 // pred_fallthru
        _
      %p1459 = scmp.le.s32.totalorder 2, %s15
      // Predicated region
      $region49: #{tpu_custom_call.1} parent=5 // pred_check
        %p1460 = pneg %p1459
      $region50: #{tpu_custom_call.1} parent=5 // pred_check_branch
        %1462 = sbr.rel (%p1460) target = $region52
      $region51: #{tpu_custom_call.1} parent=5 // pred_region
        %s1463 = ssub.s32 %s15, 2
        // Predicated region
        $region53: #{tpu_custom_call.1} parent=51 // pred_check
          %p1464 = pneg %p110
        $region54: #{tpu_custom_call.1} parent=51 // pred_check_branch
          %1466 = sbr.rel (%p1464) target = $region56
        $region55: #{tpu_custom_call.1} parent=51 // pred_region
          %s1467 = sand.u32 %s95, 1
          %s1468 = scalar_lea.sflag [#allocation5], %s1467
          %s1469 = sand.u32 %s95, 1
          %s1470 = smul.addr %s1469, 128
          %s1471 = scalar_lea.vmem [#allocation8], %s1470
          %1473 = dma.done %s1468, 2048
        $region56: #{tpu_custom_call.1} parent=51 // pred_fallthru
          _
      $region52: #{tpu_custom_call.1} parent=5 // pred_fallthru
        _
    $region6: #{tpu_custom_call.1} parent=1 // loop_footer
      %s19 = sadd.s32 1, %s15
    $region7: #{tpu_custom_call.1} parent=1 // loop_footer_branch
      %14 = sbr.rel target = $region3
    $region8: #{tpu_custom_call.1} parent=1 // loop_exit
      _
    %1474 = vsyncpa [#allocation4], 1
    %s1475 = scalar_lea.sflag [#allocation4], 1
    %1476 = vsyncpa %s1475, 1
    %1477 = vsyncpa [#allocation7], 1
    %1478 = vsyncpa [#allocation5], 1
    %s1479 = scalar_lea.sflag [#allocation5], 1
    %1480 = vsyncpa %s1479, 1

</llo_original>
